<compile_context>
chip_gen: v7x
topology: tpu7x:2x2x1
jax: 0.10.0
libtpu: 0.0.40
codegen_flags: <defaults>
</compile_context>

<pallas_src>
import jax
import jax.numpy as jnp
from jax import lax
from jax.experimental import pallas as pl
from jax.experimental.pallas import tpu as pltpu


def _make_kernel(H, layer_meta, approx_silu):
    """layer_meta: list of (d_in, apply_silu); d_in is the row dilation of the
    layer's input grid (product of all previous strides)."""

    def kernel(x_ref, rowidx_ref, *refs):
        out_ref = refs[-1]
        prm = refs[:-1]                                  # [M_1, b_1, ..., M_L, b_L]
        rr = rowidx_ref[...]                             # (BH, 1) int32 row-in-batch
        act = x_ref[0].astype(jnp.float32)               # (BH, Win*Cin) lane-dense
        bh = act.shape[0]

        for l, (d, apply_silu) in enumerate(layer_meta):
            m_ref, b_ref = prm[2 * l], prm[2 * l + 1]
            # Vertical taps: rows r-d (dy=0), r (dy=1), r+d (dy=2).  The mask
            # implements the H zero-padding and also kills roll wrap-around /
            # cross-batch-element rows (batch is folded into the row axis).
            up = pltpu.roll(act, shift=d, axis=0)        # [r] = act[r - d]
            dn = pltpu.roll(act, shift=bh - d, axis=0)   # [r] = act[r + d]
            r0 = jnp.where(rr < d, 0.0, up)
            r2 = jnp.where(rr >= H - d, 0.0, dn)
            rows = jnp.concatenate([r0, act, r2], axis=1)        # (BH, 3*Win*Cin)

            acc = jnp.dot(rows.astype(m_ref.dtype), m_ref[...],  # one MXU matmul/layer
                          preferred_element_type=jnp.float32)
            acc = acc + b_ref[...]                               # (1, N) bias row
            if apply_silu:
                # SiLU; reciprocal on the (otherwise idle) EUP when approx=True.
                acc = acc * pl.reciprocal(1.0 + jnp.exp(-acc), approx=approx_silu)
            act = acc

        out_ref[0] = act.astype(out_ref.dtype)

    return kernel


def _layer_constants(w, b, stride, win, mxu_dtype, pad_n_to=None):
    """Torch Conv2d (w:(Cout,Cin,3,3), b:(Cout,), stride, pad=1) ->
    K-concatenated block-Toeplitz matrix M_cat:(3*Win*Cin, Wout*Cout) handling
    horizontal taps / W-stride / W-padding / channel mixing, plus a tiled bias
    row.  Built once in XLA (tiny)."""
    cout, cin, kh, kw = w.shape
    assert (kh, kw) == (3, 3)
    wout = (win - 1) // stride + 1

    wk = jnp.transpose(w.astype(jnp.float32), (2, 3, 1, 0))     # (kh, kw, Cin, Cout)
    wi = jnp.arange(win)
    wo = jnp.arange(wout)
    dx = wi[:, None] - stride * wo[None, :] + 1                 # horizontal tap index
    valid = ((dx >= 0) & (dx <= 2)).astype(jnp.float32)         # zero padding along W
    dxc = jnp.clip(dx, 0, 2)

    mats = []
    for dy in range(3):                                         # vertical taps, concat on K
        g = wk[dy][dxc] * valid[:, :, None, None]               # (win, wout, Cin, Cout)
        g = jnp.transpose(g, (0, 2, 1, 3)).reshape(win * cin, wout * cout)
        mats.append(g)
    m_cat = jnp.concatenate(mats, axis=0)                       # (3*win*Cin, wout*Cout)
    brow = jnp.tile(b.astype(jnp.float32), wout).reshape(1, wout * cout)

    if pad_n_to is not None and m_cat.shape[1] < pad_n_to:      # lane-dense final store
        pad = pad_n_to - m_cat.shape[1]
        m_cat = jnp.pad(m_cat, ((0, 0), (0, pad)))
        brow = jnp.pad(brow, ((0, 0), (0, pad)))
    return m_cat.astype(mxu_dtype), brow, wout, cout


def _num_programs_default(batch):
    """One program per TensorCore: 2 on v7x, 1 on v5e/v6e (grid=(1,) avoids
    per-grid-step overhead, which dominates this tiny workload)."""
    try:
        kind = jax.devices()[0].device_kind.lower()
    except Exception:
        kind = ""
    if ("v7" in kind or "tpu7" in kind) and batch >= 2 and batch % 2 == 0:
        return 2
    return 1


def discriminator_forward(x_nchw, params, *, mxu_dtype=jnp.bfloat16,
                          approx_silu=True, num_programs=None):
    """x_nchw: (B, C, H, W); params: list of (w (Cout,Cin,3,3), b (Cout,), stride)."""
    B, C, H, W = x_nchw.shape
    d_total = 1
    for (_, _, s) in params:
        d_total *= s
    assert H % d_total == 0, "dilated-row scheme needs H % prod(strides) == 0"

    G = num_programs if num_programs is not None else _num_programs_default(B)
    assert B % G == 0
    bp = B // G
    bh = bp * H

    # Per-layer constants + row-dilation schedule.
    consts, meta = [], []
    win, cin, d = W, C, 1
    nl = len(params)
    for i, (w, b, s) in enumerate(params):
        assert w.shape[1] == cin
        last = (i == nl - 1)
        wcout = ((win - 1) // s + 1) * w.shape[0]
        pad_n = ((wcout + 127) // 128) * 128 if last else None
        m_cat, brow, wout, cout = _layer_constants(w, b, s, win, mxu_dtype, pad_n)
        consts.append((m_cat, brow))
        meta.append((d, not last))                      # SiLU on all but the last conv
        win, cin = wout, cout
        d *= s
    wf, cf = win, cin
    n_out = consts[-1][0].shape[1]
    hf = H // d_total

    # Single input relayout: NCHW -> (G, Bp*H, W*C); W*C on lanes, batch folded
    # into the matmul row (sublane/M) dimension.
    x_rows = jnp.transpose(x_nchw, (0, 2, 3, 1)).reshape(G, bh, W * C)
    rowidx = jnp.tile(jnp.arange(H, dtype=jnp.int32), bp).reshape(bh, 1)

    in_arrays = [x_rows, rowidx]
    in_specs = [
        pl.BlockSpec((1, bh, W * C), lambda g: (g, 0, 0)),
        pl.BlockSpec((bh, 1), lambda g: (0, 0)),
    ]
    for (m_cat, brow) in consts:
        in_arrays += [m_cat, brow]
        # Constant block index across the grid -> weights stay resident in VMEM.
        # (pipeline_mode=pl.Buffered(1) would halve their footprint; irrelevant
        #  at this size so we keep the default.)
        in_specs += [
            pl.BlockSpec(m_cat.shape, lambda g: (0, 0)),
            pl.BlockSpec(brow.shape, lambda g: (0, 0)),
        ]

    out_rows = pl.pallas_call(
        _make_kernel(H, meta, approx_silu),
        out_shape=jax.ShapeDtypeStruct((G, bh, n_out), jnp.float32),
        grid_spec=pltpu.PrefetchScalarGridSpec(
            num_scalar_prefetch=0,
            grid=(G,),
            in_specs=in_specs,
            out_specs=pl.BlockSpec((1, bh, n_out), lambda g: (g, 0, 0)),
        ),
        compiler_params=pltpu.CompilerParams(
            dimension_semantics=("parallel",),
        ),
    )(*in_arrays)

    # (G, Bp*H, n_out): keep the valid rows (every d_total-th) and the real
    # output lanes, then back to NCHW.
    out = out_rows.reshape(B * H, n_out)[::d_total, : wf * cf]
    return jnp.transpose(out.reshape(B, hf, wf, cf), (0, 3, 1, 2))


def _reference_forward(x, params):
    """Pure-JAX reference mirroring the PyTorch Discriminator forward."""
    act = x.astype(jnp.float32)
    for i, (w, b, s) in enumerate(params):
        act = lax.conv_general_dilated(
            act, w.astype(jnp.float32), window_strides=(s, s),
            padding=((1, 1), (1, 1)),
            dimension_numbers=("NCHW", "OIHW", "NCHW"),
            precision=lax.Precision.HIGHEST)
        act = act + b[None, :, None, None]
        if i + 1 < len(params):
            act = act * jax.nn.sigmoid(act)              # SiLU
    return act


if __name__ == "__main__":
    # Discriminator(inchan=4, scaling=8); input (B=2, C=4, H=W=16).
    inchan, scaling = 4, 8
    B, H, W = 2, 16, 16
    chans = [inchan, scaling, scaling * 2, scaling * 4, scaling * 8, 1]
    strides = [1, 2, 2, 2, 1]

    key = jax.random.PRNGKey(0)
    params = []
    for i, (cin, cout) in enumerate(zip(chans[:-1], chans[1:])):
        key, kw_, kb_ = jax.random.split(key, 3)
        w = jax.random.uniform(kw_, (cout, cin, 3, 3), jnp.float32, -0.25, 0.25)
        b = jax.random.uniform(kb_, (cout,), jnp.float32, -0.1, 0.1)
        params.append((w, b, strides[i]))
    key, kx = jax.random.split(key)
    x = jax.random.normal(kx, (B, inchan, H, W), jnp.float32)

    ref = _reference_forward(x, params)
    ref_max = float(jnp.max(jnp.abs(ref)))

    # Structural check: exact f32 MXU path, exact SiLU reciprocal.
    out_f32 = discriminator_forward(x, params, mxu_dtype=jnp.float32,
                                    approx_silu=False)
    jax.block_until_ready(out_f32)
    assert out_f32.shape == ref.shape == (B, 1, H // 8, W // 8), (out_f32.shape, ref.shape)
    err_f32 = float(jnp.max(jnp.abs(out_f32 - ref)))
    assert err_f32 < 2e-2, f"f32 path max abs err {err_f32}"

    # Production path: bf16 MXU operands (f32 accumulation) + EUP approx recip.
    out = discriminator_forward(x, params)
    jax.block_until_ready(out)
    assert out.shape == ref.shape
    err_bf16 = float(jnp.max(jnp.abs(out - ref)))
    assert err_bf16 < 3e-2 + 0.1 * ref_max, f"bf16 path max abs err {err_bf16}"

    print("KERNEL_OK")
</pallas_src>

<mosaic_0001>
module attributes {stable_mosaic.version = 11 : i64} {
  func.func @kernel(%arg0: i32, %arg1: memref<1x32x64xf32, #tpu.memory_space<vmem>>, %arg2: memref<32x1xi32, #tpu.memory_space<vmem>>, %arg3: memref<192x128xf32, #tpu.memory_space<vmem>>, %arg4: memref<1x128xf32, #tpu.memory_space<vmem>>, %arg5: memref<384x128xf32, #tpu.memory_space<vmem>>, %arg6: memref<1x128xf32, #tpu.memory_space<vmem>>, %arg7: memref<384x128xf32, #tpu.memory_space<vmem>>, %arg8: memref<1x128xf32, #tpu.memory_space<vmem>>, %arg9: memref<384x128xf32, #tpu.memory_space<vmem>>, %arg10: memref<1x128xf32, #tpu.memory_space<vmem>>, %arg11: memref<384x128xf32, #tpu.memory_space<vmem>>, %arg12: memref<1x128xf32, #tpu.memory_space<vmem>>, %arg13: memref<1x32x128xf32, #tpu.memory_space<vmem>>) attributes {dimension_semantics = [#tpu.dimension_semantics<parallel>], iteration_bounds = array<i64: 1>, scalar_prefetch = 0 : i64, scratch_operands = 0 : i64, tpu.core_type = #tpu.core_type<tc>, window_params = [{transform_indices = @transform_0, window_bounds = array<i64: 1, 32, 64>}, {pipeline_mode = #tpu.pipeline_mode<synchronous>, transform_indices = @transform_1, window_bounds = array<i64: 32, 1>}, {pipeline_mode = #tpu.pipeline_mode<synchronous>, transform_indices = @transform_2, window_bounds = array<i64: 192, 128>}, {pipeline_mode = #tpu.pipeline_mode<synchronous>, transform_indices = @transform_3, window_bounds = array<i64: 1, 128>}, {pipeline_mode = #tpu.pipeline_mode<synchronous>, transform_indices = @transform_4, window_bounds = array<i64: 384, 128>}, {pipeline_mode = #tpu.pipeline_mode<synchronous>, transform_indices = @transform_5, window_bounds = array<i64: 1, 128>}, {pipeline_mode = #tpu.pipeline_mode<synchronous>, transform_indices = @transform_6, window_bounds = array<i64: 384, 128>}, {pipeline_mode = #tpu.pipeline_mode<synchronous>, transform_indices = @transform_7, window_bounds = array<i64: 1, 128>}, {pipeline_mode = #tpu.pipeline_mode<synchronous>, transform_indices = @transform_8, window_bounds = array<i64: 384, 128>}, {pipeline_mode = #tpu.pipeline_mode<synchronous>, transform_indices = @transform_9, window_bounds = array<i64: 1, 128>}, {pipeline_mode = #tpu.pipeline_mode<synchronous>, transform_indices = @transform_10, window_bounds = array<i64: 384, 128>}, {pipeline_mode = #tpu.pipeline_mode<synchronous>, transform_indices = @transform_11, window_bounds = array<i64: 1, 128>}, {transform_indices = @transform_12, window_bounds = array<i64: 1, 32, 128>}]} {
    %c0 = arith.constant 0 : index
    %c0_0 = arith.constant 0 : index
    %0 = vector.load %arg2[%c0, %c0_0] : memref<32x1xi32, #tpu.memory_space<vmem>>, vector<32x1xi32>
    %c0_1 = arith.constant 0 : index
    %c0_2 = arith.constant 0 : index
    %c0_3 = arith.constant 0 : index
    %1 = vector.load %arg1[%c0_1, %c0_2, %c0_3] : memref<1x32x64xf32, #tpu.memory_space<vmem>>, vector<1x32x64xf32>
    %2 = vector.shape_cast %1 : vector<1x32x64xf32> to vector<32x64xf32>
    %c1_i32 = arith.constant 1 : i32
    %3 = tpu.dynamic_rotate %2 by %c1_i32 dim 0 : vector<32x64xf32>, i32 -> vector<32x64xf32>
    %c31_i32 = arith.constant 31 : i32
    %4 = tpu.dynamic_rotate %2 by %c31_i32 dim 0 : vector<32x64xf32>, i32 -> vector<32x64xf32>
    %c1_i32_4 = arith.constant 1 : i32
    %5 = vector.broadcast %c1_i32_4 : i32 to vector<32x1xi32>
    %6 = arith.cmpi slt, %0, %5 : vector<32x1xi32>
    %cst = arith.constant 0.000000e+00 : f32
    %7 = vector.shape_cast %6 : vector<32x1xi1> to vector<32x1xi1>
    %8 = vector.broadcast %7 : vector<32x1xi1> to vector<32x64xi1>
    %9 = vector.broadcast %cst : f32 to vector<32x64xf32>
    %10 = arith.select %8, %9, %3 : vector<32x64xi1>, vector<32x64xf32>
    %c15_i32 = arith.constant 15 : i32
    %11 = vector.broadcast %c15_i32 : i32 to vector<32x1xi32>
    %12 = arith.cmpi sge, %0, %11 : vector<32x1xi32>
    %cst_5 = arith.constant 0.000000e+00 : f32
    %13 = vector.shape_cast %12 : vector<32x1xi1> to vector<32x1xi1>
    %14 = vector.broadcast %13 : vector<32x1xi1> to vector<32x64xi1>
    %15 = vector.broadcast %cst_5 : f32 to vector<32x64xf32>
    %16 = arith.select %14, %15, %4 : vector<32x64xi1>, vector<32x64xf32>
    %17 = tpu.concatenate %10, %2, %16 in 1 : vector<32x64xf32>, vector<32x64xf32>, vector<32x64xf32> -> vector<32x192xf32>
    %c0_6 = arith.constant 0 : index
    %c0_7 = arith.constant 0 : index
    %18 = vector.load %arg3[%c0_6, %c0_7] : memref<192x128xf32, #tpu.memory_space<vmem>>, vector<192x128xf32>
    %cst_8 = arith.constant dense<0.000000e+00> : vector<32x128xf32>
    %19 = tpu.matmul %17, %18, %cst_8 {dimension_numbers = #tpu.dot_dimension_numbers<[1], [0], [0], [1], [0, 0, 1, 1], [], []>} : vector<32x192xf32>, vector<192x128xf32>, vector<32x128xf32> -> vector<32x128xf32>
    %c0_9 = arith.constant 0 : index
    %c0_10 = arith.constant 0 : index
    %20 = vector.load %arg4[%c0_9, %c0_10] : memref<1x128xf32, #tpu.memory_space<vmem>>, vector<1x128xf32>
    %21 = vector.broadcast %20 : vector<1x128xf32> to vector<32x128xf32>
    %22 = arith.addf %19, %21 : vector<32x128xf32>
    %cst_11 = arith.constant 0.000000e+00 : f32
    %23 = vector.broadcast %cst_11 : f32 to vector<32x128xf32>
    %24 = arith.subf %23, %22 : vector<32x128xf32>
    %25 = math.exp %24 : vector<32x128xf32>
    %cst_12 = arith.constant 1.000000e+00 : f32
    %26 = vector.broadcast %cst_12 : f32 to vector<32x128xf32>
    %27 = arith.addf %26, %25 : vector<32x128xf32>
    %28 = tpu.reciprocal %27 : vector<32x128xf32> -> vector<32x128xf32>
    %29 = arith.mulf %22, %28 : vector<32x128xf32>
    %c1_i32_13 = arith.constant 1 : i32
    %30 = tpu.dynamic_rotate %29 by %c1_i32_13 dim 0 : vector<32x128xf32>, i32 -> vector<32x128xf32>
    %c31_i32_14 = arith.constant 31 : i32
    %31 = tpu.dynamic_rotate %29 by %c31_i32_14 dim 0 : vector<32x128xf32>, i32 -> vector<32x128xf32>
    %c1_i32_15 = arith.constant 1 : i32
    %32 = vector.broadcast %c1_i32_15 : i32 to vector<32x1xi32>
    %33 = arith.cmpi slt, %0, %32 : vector<32x1xi32>
    %cst_16 = arith.constant 0.000000e+00 : f32
    %34 = vector.shape_cast %33 : vector<32x1xi1> to vector<32x1xi1>
    %35 = vector.broadcast %34 : vector<32x1xi1> to vector<32x128xi1>
    %36 = vector.broadcast %cst_16 : f32 to vector<32x128xf32>
    %37 = arith.select %35, %36, %30 : vector<32x128xi1>, vector<32x128xf32>
    %c15_i32_17 = arith.constant 15 : i32
    %38 = vector.broadcast %c15_i32_17 : i32 to vector<32x1xi32>
    %39 = arith.cmpi sge, %0, %38 : vector<32x1xi32>
    %cst_18 = arith.constant 0.000000e+00 : f32
    %40 = vector.shape_cast %39 : vector<32x1xi1> to vector<32x1xi1>
    %41 = vector.broadcast %40 : vector<32x1xi1> to vector<32x128xi1>
    %42 = vector.broadcast %cst_18 : f32 to vector<32x128xf32>
    %43 = arith.select %41, %42, %31 : vector<32x128xi1>, vector<32x128xf32>
    %44 = tpu.concatenate %37, %29, %43 in 1 : vector<32x128xf32>, vector<32x128xf32>, vector<32x128xf32> -> vector<32x384xf32>
    %c0_19 = arith.constant 0 : index
    %c0_20 = arith.constant 0 : index
    %45 = vector.load %arg5[%c0_19, %c0_20] : memref<384x128xf32, #tpu.memory_space<vmem>>, vector<384x128xf32>
    %cst_21 = arith.constant dense<0.000000e+00> : vector<32x128xf32>
    %46 = tpu.matmul %44, %45, %cst_21 {dimension_numbers = #tpu.dot_dimension_numbers<[1], [0], [0], [1], [0, 0, 1, 1], [], []>} : vector<32x384xf32>, vector<384x128xf32>, vector<32x128xf32> -> vector<32x128xf32>
    %c0_22 = arith.constant 0 : index
    %c0_23 = arith.constant 0 : index
    %47 = vector.load %arg6[%c0_22, %c0_23] : memref<1x128xf32, #tpu.memory_space<vmem>>, vector<1x128xf32>
    %48 = vector.broadcast %47 : vector<1x128xf32> to vector<32x128xf32>
    %49 = arith.addf %46, %48 : vector<32x128xf32>
    %cst_24 = arith.constant 0.000000e+00 : f32
    %50 = vector.broadcast %cst_24 : f32 to vector<32x128xf32>
    %51 = arith.subf %50, %49 : vector<32x128xf32>
    %52 = math.exp %51 : vector<32x128xf32>
    %cst_25 = arith.constant 1.000000e+00 : f32
    %53 = vector.broadcast %cst_25 : f32 to vector<32x128xf32>
    %54 = arith.addf %53, %52 : vector<32x128xf32>
    %55 = tpu.reciprocal %54 : vector<32x128xf32> -> vector<32x128xf32>
    %56 = arith.mulf %49, %55 : vector<32x128xf32>
    %c2_i32 = arith.constant 2 : i32
    %57 = tpu.dynamic_rotate %56 by %c2_i32 dim 0 : vector<32x128xf32>, i32 -> vector<32x128xf32>
    %c30_i32 = arith.constant 30 : i32
    %58 = tpu.dynamic_rotate %56 by %c30_i32 dim 0 : vector<32x128xf32>, i32 -> vector<32x128xf32>
    %c2_i32_26 = arith.constant 2 : i32
    %59 = vector.broadcast %c2_i32_26 : i32 to vector<32x1xi32>
    %60 = arith.cmpi slt, %0, %59 : vector<32x1xi32>
    %cst_27 = arith.constant 0.000000e+00 : f32
    %61 = vector.shape_cast %60 : vector<32x1xi1> to vector<32x1xi1>
    %62 = vector.broadcast %61 : vector<32x1xi1> to vector<32x128xi1>
    %63 = vector.broadcast %cst_27 : f32 to vector<32x128xf32>
    %64 = arith.select %62, %63, %57 : vector<32x128xi1>, vector<32x128xf32>
    %c14_i32 = arith.constant 14 : i32
    %65 = vector.broadcast %c14_i32 : i32 to vector<32x1xi32>
    %66 = arith.cmpi sge, %0, %65 : vector<32x1xi32>
    %cst_28 = arith.constant 0.000000e+00 : f32
    %67 = vector.shape_cast %66 : vector<32x1xi1> to vector<32x1xi1>
    %68 = vector.broadcast %67 : vector<32x1xi1> to vector<32x128xi1>
    %69 = vector.broadcast %cst_28 : f32 to vector<32x128xf32>
    %70 = arith.select %68, %69, %58 : vector<32x128xi1>, vector<32x128xf32>
    %71 = tpu.concatenate %64, %56, %70 in 1 : vector<32x128xf32>, vector<32x128xf32>, vector<32x128xf32> -> vector<32x384xf32>
    %c0_29 = arith.constant 0 : index
    %c0_30 = arith.constant 0 : index
    %72 = vector.load %arg7[%c0_29, %c0_30] : memref<384x128xf32, #tpu.memory_space<vmem>>, vector<384x128xf32>
    %cst_31 = arith.constant dense<0.000000e+00> : vector<32x128xf32>
    %73 = tpu.matmul %71, %72, %cst_31 {dimension_numbers = #tpu.dot_dimension_numbers<[1], [0], [0], [1], [0, 0, 1, 1], [], []>} : vector<32x384xf32>, vector<384x128xf32>, vector<32x128xf32> -> vector<32x128xf32>
    %c0_32 = arith.constant 0 : index
    %c0_33 = arith.constant 0 : index
    %74 = vector.load %arg8[%c0_32, %c0_33] : memref<1x128xf32, #tpu.memory_space<vmem>>, vector<1x128xf32>
    %75 = vector.broadcast %74 : vector<1x128xf32> to vector<32x128xf32>
    %76 = arith.addf %73, %75 : vector<32x128xf32>
    %cst_34 = arith.constant 0.000000e+00 : f32
    %77 = vector.broadcast %cst_34 : f32 to vector<32x128xf32>
    %78 = arith.subf %77, %76 : vector<32x128xf32>
    %79 = math.exp %78 : vector<32x128xf32>
    %cst_35 = arith.constant 1.000000e+00 : f32
    %80 = vector.broadcast %cst_35 : f32 to vector<32x128xf32>
    %81 = arith.addf %80, %79 : vector<32x128xf32>
    %82 = tpu.reciprocal %81 : vector<32x128xf32> -> vector<32x128xf32>
    %83 = arith.mulf %76, %82 : vector<32x128xf32>
    %c4_i32 = arith.constant 4 : i32
    %84 = tpu.dynamic_rotate %83 by %c4_i32 dim 0 : vector<32x128xf32>, i32 -> vector<32x128xf32>
    %c28_i32 = arith.constant 28 : i32
    %85 = tpu.dynamic_rotate %83 by %c28_i32 dim 0 : vector<32x128xf32>, i32 -> vector<32x128xf32>
    %c4_i32_36 = arith.constant 4 : i32
    %86 = vector.broadcast %c4_i32_36 : i32 to vector<32x1xi32>
    %87 = arith.cmpi slt, %0, %86 : vector<32x1xi32>
    %cst_37 = arith.constant 0.000000e+00 : f32
    %88 = vector.shape_cast %87 : vector<32x1xi1> to vector<32x1xi1>
    %89 = vector.broadcast %88 : vector<32x1xi1> to vector<32x128xi1>
    %90 = vector.broadcast %cst_37 : f32 to vector<32x128xf32>
    %91 = arith.select %89, %90, %84 : vector<32x128xi1>, vector<32x128xf32>
    %c12_i32 = arith.constant 12 : i32
    %92 = vector.broadcast %c12_i32 : i32 to vector<32x1xi32>
    %93 = arith.cmpi sge, %0, %92 : vector<32x1xi32>
    %cst_38 = arith.constant 0.000000e+00 : f32
    %94 = vector.shape_cast %93 : vector<32x1xi1> to vector<32x1xi1>
    %95 = vector.broadcast %94 : vector<32x1xi1> to vector<32x128xi1>
    %96 = vector.broadcast %cst_38 : f32 to vector<32x128xf32>
    %97 = arith.select %95, %96, %85 : vector<32x128xi1>, vector<32x128xf32>
    %98 = tpu.concatenate %91, %83, %97 in 1 : vector<32x128xf32>, vector<32x128xf32>, vector<32x128xf32> -> vector<32x384xf32>
    %c0_39 = arith.constant 0 : index
    %c0_40 = arith.constant 0 : index
    %99 = vector.load %arg9[%c0_39, %c0_40] : memref<384x128xf32, #tpu.memory_space<vmem>>, vector<384x128xf32>
    %cst_41 = arith.constant dense<0.000000e+00> : vector<32x128xf32>
    %100 = tpu.matmul %98, %99, %cst_41 {dimension_numbers = #tpu.dot_dimension_numbers<[1], [0], [0], [1], [0, 0, 1, 1], [], []>} : vector<32x384xf32>, vector<384x128xf32>, vector<32x128xf32> -> vector<32x128xf32>
    %c0_42 = arith.constant 0 : index
    %c0_43 = arith.constant 0 : index
    %101 = vector.load %arg10[%c0_42, %c0_43] : memref<1x128xf32, #tpu.memory_space<vmem>>, vector<1x128xf32>
    %102 = vector.broadcast %101 : vector<1x128xf32> to vector<32x128xf32>
    %103 = arith.addf %100, %102 : vector<32x128xf32>
    %cst_44 = arith.constant 0.000000e+00 : f32
    %104 = vector.broadcast %cst_44 : f32 to vector<32x128xf32>
    %105 = arith.subf %104, %103 : vector<32x128xf32>
    %106 = math.exp %105 : vector<32x128xf32>
    %cst_45 = arith.constant 1.000000e+00 : f32
    %107 = vector.broadcast %cst_45 : f32 to vector<32x128xf32>
    %108 = arith.addf %107, %106 : vector<32x128xf32>
    %109 = tpu.reciprocal %108 : vector<32x128xf32> -> vector<32x128xf32>
    %110 = arith.mulf %103, %109 : vector<32x128xf32>
    %c8_i32 = arith.constant 8 : i32
    %111 = tpu.dynamic_rotate %110 by %c8_i32 dim 0 : vector<32x128xf32>, i32 -> vector<32x128xf32>
    %c24_i32 = arith.constant 24 : i32
    %112 = tpu.dynamic_rotate %110 by %c24_i32 dim 0 : vector<32x128xf32>, i32 -> vector<32x128xf32>
    %c8_i32_46 = arith.constant 8 : i32
    %113 = vector.broadcast %c8_i32_46 : i32 to vector<32x1xi32>
    %114 = arith.cmpi slt, %0, %113 : vector<32x1xi32>
    %cst_47 = arith.constant 0.000000e+00 : f32
    %115 = vector.shape_cast %114 : vector<32x1xi1> to vector<32x1xi1>
    %116 = vector.broadcast %115 : vector<32x1xi1> to vector<32x128xi1>
    %117 = vector.broadcast %cst_47 : f32 to vector<32x128xf32>
    %118 = arith.select %116, %117, %111 : vector<32x128xi1>, vector<32x128xf32>
    %c8_i32_48 = arith.constant 8 : i32
    %119 = vector.broadcast %c8_i32_48 : i32 to vector<32x1xi32>
    %120 = arith.cmpi sge, %0, %119 : vector<32x1xi32>
    %cst_49 = arith.constant 0.000000e+00 : f32
    %121 = vector.shape_cast %120 : vector<32x1xi1> to vector<32x1xi1>
    %122 = vector.broadcast %121 : vector<32x1xi1> to vector<32x128xi1>
    %123 = vector.broadcast %cst_49 : f32 to vector<32x128xf32>
    %124 = arith.select %122, %123, %112 : vector<32x128xi1>, vector<32x128xf32>
    %125 = tpu.concatenate %118, %110, %124 in 1 : vector<32x128xf32>, vector<32x128xf32>, vector<32x128xf32> -> vector<32x384xf32>
    %c0_50 = arith.constant 0 : index
    %c0_51 = arith.constant 0 : index
    %126 = vector.load %arg11[%c0_50, %c0_51] : memref<384x128xf32, #tpu.memory_space<vmem>>, vector<384x128xf32>
    %cst_52 = arith.constant dense<0.000000e+00> : vector<32x128xf32>
    %127 = tpu.matmul %125, %126, %cst_52 {dimension_numbers = #tpu.dot_dimension_numbers<[1], [0], [0], [1], [0, 0, 1, 1], [], []>} : vector<32x384xf32>, vector<384x128xf32>, vector<32x128xf32> -> vector<32x128xf32>
    %c0_53 = arith.constant 0 : index
    %c0_54 = arith.constant 0 : index
    %128 = vector.load %arg12[%c0_53, %c0_54] : memref<1x128xf32, #tpu.memory_space<vmem>>, vector<1x128xf32>
    %129 = vector.broadcast %128 : vector<1x128xf32> to vector<32x128xf32>
    %130 = arith.addf %127, %129 : vector<32x128xf32>
    %c0_55 = arith.constant 0 : index
    %c0_56 = arith.constant 0 : index
    %c0_57 = arith.constant 0 : index
    %131 = vector.load %arg13[%c0_55, %c0_56, %c0_57] : memref<1x32x128xf32, #tpu.memory_space<vmem>>, vector<1x32x128xf32>
    %132 = vector.shape_cast %131 : vector<1x32x128xf32> to vector<32x128xf32>
    %133 = vector.shape_cast %130 : vector<32x128xf32> to vector<1x32x128xf32>
    tpu.vector_store %arg13[%c0_55, %c0_56, %c0_57], %133 {strides = array<i32>} : memref<1x32x128xf32, #tpu.memory_space<vmem>>, vector<1x32x128xf32>,
    return
  }
  func.func @transform_0(%arg0: i32) -> (i32, i32, i32) {
    %c0_i32 = arith.constant 0 : i32
    %c0_i32_0 = arith.constant 0 : i32
    %c0_i32_1 = arith.constant 0 : i32
    return %arg0, %c0_i32, %c0_i32_0 : i32, i32, i32
  }
  func.func @transform_1(%arg0: i32) -> (i32, i32) {
    %c0_i32 = arith.constant 0 : i32
    %c0_i32_0 = arith.constant 0 : i32
    %c0_i32_1 = arith.constant 0 : i32
    return %c0_i32, %c0_i32_0 : i32, i32
  }
  func.func @transform_2(%arg0: i32) -> (i32, i32) {
    %c0_i32 = arith.constant 0 : i32
    %c0_i32_0 = arith.constant 0 : i32
    %c0_i32_1 = arith.constant 0 : i32
    return %c0_i32, %c0_i32_0 : i32, i32
  }
  func.func @transform_3(%arg0: i32) -> (i32, i32) {
    %c0_i32 = arith.constant 0 : i32
    %c0_i32_0 = arith.constant 0 : i32
    %c0_i32_1 = arith.constant 0 : i32
    return %c0_i32, %c0_i32_0 : i32, i32
  }
  func.func @transform_4(%arg0: i32) -> (i32, i32) {
    %c0_i32 = arith.constant 0 : i32
    %c0_i32_0 = arith.constant 0 : i32
    %c0_i32_1 = arith.constant 0 : i32
    return %c0_i32, %c0_i32_0 : i32, i32
  }
  func.func @transform_5(%arg0: i32) -> (i32, i32) {
    %c0_i32 = arith.constant 0 : i32
    %c0_i32_0 = arith.constant 0 : i32
    %c0_i32_1 = arith.constant 0 : i32
    return %c0_i32, %c0_i32_0 : i32, i32
  }
  func.func @transform_6(%arg0: i32) -> (i32, i32) {
    %c0_i32 = arith.constant 0 : i32
    %c0_i32_0 = arith.constant 0 : i32
    %c0_i32_1 = arith.constant 0 : i32
    return %c0_i32, %c0_i32_0 : i32, i32
  }
  func.func @transform_7(%arg0: i32) -> (i32, i32) {
    %c0_i32 = arith.constant 0 : i32
    %c0_i32_0 = arith.constant 0 : i32
    %c0_i32_1 = arith.constant 0 : i32
    return %c0_i32, %c0_i32_0 : i32, i32
  }
  func.func @transform_8(%arg0: i32) -> (i32, i32) {
    %c0_i32 = arith.constant 0 : i32
    %c0_i32_0 = arith.constant 0 : i32
    %c0_i32_1 = arith.constant 0 : i32
    return %c0_i32, %c0_i32_0 : i32, i32
  }
  func.func @transform_9(%arg0: i32) -> (i32, i32) {
    %c0_i32 = arith.constant 0 : i32
    %c0_i32_0 = arith.constant 0 : i32
    %c0_i32_1 = arith.constant 0 : i32
    return %c0_i32, %c0_i32_0 : i32, i32
  }
  func.func @transform_10(%arg0: i32) -> (i32, i32) {
    %c0_i32 = arith.constant 0 : i32
    %c0_i32_0 = arith.constant 0 : i32
    %c0_i32_1 = arith.constant 0 : i32
    return %c0_i32, %c0_i32_0 : i32, i32
  }
  func.func @transform_11(%arg0: i32) -> (i32, i32) {
    %c0_i32 = arith.constant 0 : i32
    %c0_i32_0 = arith.constant 0 : i32
    %c0_i32_1 = arith.constant 0 : i32
    return %c0_i32, %c0_i32_0 : i32, i32
  }
  func.func @transform_12(%arg0: i32) -> (i32, i32, i32) {
    %c0_i32 = arith.constant 0 : i32
    %c0_i32_0 = arith.constant 0 : i32
    %c0_i32_1 = arith.constant 0 : i32
    return %arg0, %c0_i32, %c0_i32_0 : i32, i32, i32
  }
}

</mosaic_0001>

<llo_original>
// kernel: tpu_custom_call.1
$region0: #{tpu_custom_call.1}
  #allocation0 [shape = 'u32[]', space=smem, size = 0x4, offset = 0x4, fixed_abs, tag = 'smem constant byte address 0x4 - core index']
  #allocation1 [shape = 'u32[144,128]{1,0:T(1,128)}', space=vmem, size = 0x12000, scoped, tag = 'internal scratch']
  %s0 = inlined_call_operand.vmem [shape: f32[1,32,64], index: 0, kind: input, shape index: {}]
  %s1 = inlined_call_operand.vmem [shape: s32[32,1], index: 1, kind: input, shape index: {}]
  %s2 = inlined_call_operand.hbm [shape: f32[192,128], index: 2, kind: input, shape index: {}]
  %s3 = inlined_call_operand.vmem [shape: f32[1,128], index: 3, kind: input, shape index: {}]
  %s4 = inlined_call_operand.hbm [shape: f32[384,128], index: 4, kind: input, shape index: {}]
  %s5 = inlined_call_operand.vmem [shape: f32[1,128], index: 5, kind: input, shape index: {}]
  %s6 = inlined_call_operand.hbm [shape: f32[384,128], index: 6, kind: input, shape index: {}]
  %s7 = inlined_call_operand.vmem [shape: f32[1,128], index: 7, kind: input, shape index: {}]
  %s8 = inlined_call_operand.hbm [shape: f32[384,128], index: 8, kind: input, shape index: {}]
  %s9 = inlined_call_operand.vmem [shape: f32[1,128], index: 9, kind: input, shape index: {}]
  %s10 = inlined_call_operand.hbm [shape: f32[384,128], index: 10, kind: input, shape index: {}]
  %s11 = inlined_call_operand.vmem [shape: f32[1,128], index: 11, kind: input, shape index: {}]
  %s12 = inlined_call_operand.hbm [shape: f32[1,32,128], index: 12, kind: output, shape index: {}]
  %s13 = sld [smem:[#allocation0]]
  $region78: #{tpu_custom_call.1} parent=0
    _
  %s15 = ssub.s32 1, %s13
  %s16 = scalar_select 0, %s15, %s13
  $region1: #{tpu_custom_call.1} parent=0
    #allocation2 [shape = 'u8[98304]{0}', space=vmem, size = 0x18000, scoped, tag = 'input window, operand 2, single buffered']
    #allocation3 [shape = 's32[1]{0}', space=sflag, size = 0x4, scoped, tag = 'scoped memory for tpu_custom_call.1']
    #allocation4 [shape = 's32[1]{0}', space=sflag, size = 0x4, scoped, tag = 'scoped memory for tpu_custom_call.1']
    #allocation5 [shape = 'u8[196608]{0}', space=vmem, size = 0x30000, scoped, tag = 'input window, operand 4, single buffered']
    #allocation6 [shape = 's32[1]{0}', space=sflag, size = 0x4, scoped, tag = 'scoped memory for tpu_custom_call.1']
    #allocation7 [shape = 'u8[196608]{0}', space=vmem, size = 0x30000, scoped, tag = 'input window, operand 6, single buffered']
    #allocation8 [shape = 'u8[196608]{0}', space=vmem, size = 0x30000, scoped, tag = 'input window, operand 8, single buffered']
    #allocation9 [shape = 's32[1]{0}', space=sflag, size = 0x4, scoped, tag = 'scoped memory for tpu_custom_call.1']
    #allocation10 [shape = 'u8[196608]{0}', space=vmem, size = 0x30000, scoped, tag = 'input window, operand 10, single buffered']
    #allocation11 [shape = 'u8[16384]{0}', space=vmem, size = 0x4000, scoped, tag = 'output window, operand 0, single buffered']
    %17 = vsyncpa [#allocation3], 0
    %18 = vsyncpa [#allocation6], 0
    %19 = vsyncpa [#allocation9], 0
    %20 = vsyncpa [#allocation4], 0
    // Predicated region
    $region2: #{tpu_custom_call.1} parent=1 // pred_check
      _
    $region3: #{tpu_custom_call.1} parent=1 // pred_check_branch
      %22 = sbr.rel (0) target = $region5
    $region4: #{tpu_custom_call.1} parent=1 // pred_region
      _
    $region5: #{tpu_custom_call.1} parent=1 // pred_fallthru
      _
    // Predicated region
    $region6: #{tpu_custom_call.1} parent=1 // pred_check
      _
    $region7: #{tpu_custom_call.1} parent=1 // pred_check_branch
      %24 = sbr.rel (0) target = $region9
    $region8: #{tpu_custom_call.1} parent=1 // pred_region
      _
    $region9: #{tpu_custom_call.1} parent=1 // pred_fallthru
      _
    // Predicated region
    $region10: #{tpu_custom_call.1} parent=1 // pred_check
      _
    $region11: #{tpu_custom_call.1} parent=1 // pred_check_branch
      %26 = sbr.rel (0) target = $region13
    $region12: #{tpu_custom_call.1} parent=1 // pred_region
      %s28 = ssub.s32 3072, 3072
      %29 = vsyncadd [#allocation3], %s28
      %s30 = sshll.u32 [#allocation2], 4
      %s31 = int_to_ptr.vmem [resolvable:$true] %s30
      %36 = dma.hbm_to_vmem [thread:$0]  %s2, 3072, %s31, [#allocation3], 128, 128, 8
    $region13: #{tpu_custom_call.1} parent=1 // pred_fallthru
      _
    // Predicated region
    $region14: #{tpu_custom_call.1} parent=1 // pred_check
      _
    $region15: #{tpu_custom_call.1} parent=1 // pred_check_branch
      %38 = sbr.rel (0) target = $region17
    $region16: #{tpu_custom_call.1} parent=1 // pred_region
      _
    $region17: #{tpu_custom_call.1} parent=1 // pred_fallthru
      _
    // Predicated region
    $region18: #{tpu_custom_call.1} parent=1 // pred_check
      _
    $region19: #{tpu_custom_call.1} parent=1 // pred_check_branch
      %40 = sbr.rel (0) target = $region21
    $region20: #{tpu_custom_call.1} parent=1 // pred_region
      %s42 = ssub.s32 6144, 6144
      %43 = vsyncadd [#allocation6], %s42
      %s44 = sshll.u32 [#allocation5], 4
      %s45 = int_to_ptr.vmem [resolvable:$true] %s44
      %50 = dma.hbm_to_vmem [thread:$0]  %s4, 6144, %s45, [#allocation6], 128, 128, 8
    $region21: #{tpu_custom_call.1} parent=1 // pred_fallthru
      _
    // Predicated region
    $region22: #{tpu_custom_call.1} parent=1 // pred_check
      _
    $region23: #{tpu_custom_call.1} parent=1 // pred_check_branch
      %52 = sbr.rel (0) target = $region25
    $region24: #{tpu_custom_call.1} parent=1 // pred_region
      _
    $region25: #{tpu_custom_call.1} parent=1 // pred_fallthru
      _
    // Predicated region
    $region26: #{tpu_custom_call.1} parent=1 // pred_check
      _
    $region27: #{tpu_custom_call.1} parent=1 // pred_check_branch
      %54 = sbr.rel (0) target = $region29
    $region28: #{tpu_custom_call.1} parent=1 // pred_region
      %s56 = ssub.s32 6144, 6144
      %57 = vsyncadd [#allocation6], %s56
      %s58 = sshll.u32 [#allocation7], 4
      %s59 = int_to_ptr.vmem [resolvable:$true] %s58
      %64 = dma.hbm_to_vmem [thread:$0]  %s6, 6144, %s59, [#allocation6], 128, 128, 8
    $region29: #{tpu_custom_call.1} parent=1 // pred_fallthru
      _
    // Predicated region
    $region30: #{tpu_custom_call.1} parent=1 // pred_check
      _
    $region31: #{tpu_custom_call.1} parent=1 // pred_check_branch
      %66 = sbr.rel (0) target = $region33
    $region32: #{tpu_custom_call.1} parent=1 // pred_region
      _
    $region33: #{tpu_custom_call.1} parent=1 // pred_fallthru
      _
    // Predicated region
    $region34: #{tpu_custom_call.1} parent=1 // pred_check
      _
    $region35: #{tpu_custom_call.1} parent=1 // pred_check_branch
      %68 = sbr.rel (0) target = $region37
    $region36: #{tpu_custom_call.1} parent=1 // pred_region
      %s70 = ssub.s32 6144, 6144
      %71 = vsyncadd [#allocation9], %s70
      %s72 = sshll.u32 [#allocation8], 4
      %s73 = int_to_ptr.vmem [resolvable:$true] %s72
      %78 = dma.hbm_to_vmem [thread:$0]  %s8, 6144, %s73, [#allocation9], 128, 128, 8
    $region37: #{tpu_custom_call.1} parent=1 // pred_fallthru
      _
    // Predicated region
    $region38: #{tpu_custom_call.1} parent=1 // pred_check
      _
    $region39: #{tpu_custom_call.1} parent=1 // pred_check_branch
      %80 = sbr.rel (0) target = $region41
    $region40: #{tpu_custom_call.1} parent=1 // pred_region
      _
    $region41: #{tpu_custom_call.1} parent=1 // pred_fallthru
      _
    // Predicated region
    $region42: #{tpu_custom_call.1} parent=1 // pred_check
      _
    $region43: #{tpu_custom_call.1} parent=1 // pred_check_branch
      %82 = sbr.rel (0) target = $region45
    $region44: #{tpu_custom_call.1} parent=1 // pred_region
      %s84 = ssub.s32 6144, 6144
      %85 = vsyncadd [#allocation9], %s84
      %s86 = sshll.u32 [#allocation10], 4
      %s87 = int_to_ptr.vmem [resolvable:$true] %s86
      %92 = dma.hbm_to_vmem [thread:$0]  %s10, 6144, %s87, [#allocation9], 128, 128, 8
    $region45: #{tpu_custom_call.1} parent=1 // pred_fallthru
      _
    // Predicated region
    $region46: #{tpu_custom_call.1} parent=1 // pred_check
      _
    $region47: #{tpu_custom_call.1} parent=1 // pred_check_branch
      %94 = sbr.rel (0) target = $region49
    $region48: #{tpu_custom_call.1} parent=1 // pred_region
      _
    $region49: #{tpu_custom_call.1} parent=1 // pred_fallthru
      _
    // Predicated region
    $region50: #{tpu_custom_call.1} parent=1 // pred_check
      _
    $region51: #{tpu_custom_call.1} parent=1 // pred_check_branch
      %96 = sbr.rel (0) target = $region53
    $region52: #{tpu_custom_call.1} parent=1 // pred_region
      %97 = dma.done [#allocation3], 3072
    $region53: #{tpu_custom_call.1} parent=1 // pred_fallthru
      _
    // Predicated region
    $region54: #{tpu_custom_call.1} parent=1 // pred_check
      _
    $region55: #{tpu_custom_call.1} parent=1 // pred_check_branch
      %99 = sbr.rel (0) target = $region57
    $region56: #{tpu_custom_call.1} parent=1 // pred_region
      %100 = dma.done [#allocation6], 6144
    $region57: #{tpu_custom_call.1} parent=1 // pred_fallthru
      _
    // Predicated region
    $region58: #{tpu_custom_call.1} parent=1 // pred_check
      _
    $region59: #{tpu_custom_call.1} parent=1 // pred_check_branch
      %102 = sbr.rel (0) target = $region61
    $region60: #{tpu_custom_call.1} parent=1 // pred_region
      %103 = dma.done [#allocation6], 6144
    $region61: #{tpu_custom_call.1} parent=1 // pred_fallthru
      _
    // Predicated region
    $region62: #{tpu_custom_call.1} parent=1 // pred_check
      _
    $region63: #{tpu_custom_call.1} parent=1 // pred_check_branch
      %105 = sbr.rel (0) target = $region65
    $region64: #{tpu_custom_call.1} parent=1 // pred_region
      %106 = dma.done [#allocation9], 6144
    $region65: #{tpu_custom_call.1} parent=1 // pred_fallthru
      _
    // Predicated region
    $region66: #{tpu_custom_call.1} parent=1 // pred_check
      _
    $region67: #{tpu_custom_call.1} parent=1 // pred_check_branch
      %108 = sbr.rel (0) target = $region69
    $region68: #{tpu_custom_call.1} parent=1 // pred_region
      %109 = dma.done [#allocation9], 6144
    $region69: #{tpu_custom_call.1} parent=1 // pred_fallthru
      _
    %v110 = vld [vmem:[%s1] sm:$0xff]
    %v111 = vld [vmem:[%s1 + $0x8] sm:$0xff]
    %v112 = vld [vmem:[%s1 + $0x10] sm:$0xff]
    %v113 = vld [vmem:[%s1 + $0x18] sm:$0xff]
    %v114 = vld [vmem:[%s0] sm:$0xff]
    %v115 = vld [vmem:[%s0 + $0x8] sm:$0xff]
    %v116 = vld [vmem:[%s0 + $0x10] sm:$0xff]
    %v117 = vld [vmem:[%s0 + $0x18] sm:$0xff]
    %v118 = vrot.slane %v114, 7
    %v119 = vrot.slane %v115, 7
    %v120 = vrot.slane %v116, 7
    %v121 = vrot.slane %v117, 7
    %v122 = vlaneseq
    %v123 = vshrl.u32 %v122, 7
    %vm124 = vcmp.lt.s32.totalorder %v123, 1
    %v125 = vsel %vm124, %v120, %v121
    %v126 = vsel %vm124, %v119, %v120
    %v127 = vsel %vm124, %v118, %v119
    %v128 = vsel %vm124, %v121, %v118
    %v129 = vrot.slane %v114, 1
    %v130 = vrot.slane %v115, 1
    %v131 = vrot.slane %v116, 1
    %v132 = vrot.slane %v117, 1
    %vm133 = vcmp.lt.s32.totalorder %v123, 7
    %v134 = vsel %vm133, %v131, %v132
    %v135 = vsel %vm133, %v130, %v131
    %v136 = vsel %vm133, %v129, %v130
    %v137 = vsel %vm133, %v132, %v129
    %vm138 = vcmp.lt.s32.totalorder %v110, 1
    %vm139 = vcmp.lt.s32.totalorder %v111, 1
    %vm140 = vcmp.lt.s32.totalorder %v112, 1
    %vm141 = vcmp.lt.s32.totalorder %v113, 1
    %v142 = vsel %vm138, 1, 0
    %v143 = vsel %vm139, 1, 0
    %v144 = vsel %vm140, 1, 0
    %v145 = vsel %vm141, 1, 0
    %146 = vset.pattern.permute.xlu0 0
    %147 = vperm.xlu0 %146, %v142
    %v148 = vpop.permute.xlu0 %147
    %149 = vset.pattern.permute.xlu0 0
    %150 = vperm.xlu0 %149, %v143
    %v151 = vpop.permute.xlu0 %150
    %152 = vset.pattern.permute.xlu0 0
    %153 = vperm.xlu0 %152, %v144
    %v154 = vpop.permute.xlu0 %153
    %155 = vset.pattern.permute.xlu0 0
    %156 = vperm.xlu0 %155, %v145
    %v157 = vpop.permute.xlu0 %156
    %vm158 = vcmp.eq.s32.totalorder %v148, 1
    %vm159 = vcmp.eq.s32.totalorder %v151, 1
    %vm160 = vcmp.eq.s32.totalorder %v154, 1
    %vm161 = vcmp.eq.s32.totalorder %v157, 1
    %v162 = vsel %vm158, 0.0, %v128
    %v163 = vsel %vm159, 0.0, %v127
    %v164 = vsel %vm160, 0.0, %v126
    %v165 = vsel %vm161, 0.0, %v125
    %vm166 = vcmp.ge.s32.totalorder %v110, 15
    %vm167 = vcmp.ge.s32.totalorder %v111, 15
    %vm168 = vcmp.ge.s32.totalorder %v112, 15
    %vm169 = vcmp.ge.s32.totalorder %v113, 15
    %v170 = vsel %vm166, 1, 0
    %v171 = vsel %vm167, 1, 0
    %v172 = vsel %vm168, 1, 0
    %v173 = vsel %vm169, 1, 0
    %174 = vset.pattern.permute.xlu0 0
    %175 = vperm.xlu0 %174, %v170
    %v176 = vpop.permute.xlu0 %175
    %177 = vset.pattern.permute.xlu0 0
    %178 = vperm.xlu0 %177, %v171
    %v179 = vpop.permute.xlu0 %178
    %180 = vset.pattern.permute.xlu0 0
    %181 = vperm.xlu0 %180, %v172
    %v182 = vpop.permute.xlu0 %181
    %183 = vset.pattern.permute.xlu0 0
    %184 = vperm.xlu0 %183, %v173
    %v185 = vpop.permute.xlu0 %184
    %vm186 = vcmp.eq.s32.totalorder %v176, 1
    %vm187 = vcmp.eq.s32.totalorder %v179, 1
    %vm188 = vcmp.eq.s32.totalorder %v182, 1
    %vm189 = vcmp.eq.s32.totalorder %v185, 1
    %v190 = vsel %vm186, 0.0, %v136
    %v191 = vsel %vm187, 0.0, %v135
    %v192 = vsel %vm188, 0.0, %v134
    %v193 = vsel %vm189, 0.0, %v137
    %198 = vrot.lane.b32.xlu0 %v114, 64
    %v199 = vpop.permute.xlu0 %198
    %200 = vrot.lane.b32.xlu0 %v115, 64
    %v201 = vpop.permute.xlu0 %200
    %202 = vrot.lane.b32.xlu0 %v116, 64
    %v203 = vpop.permute.xlu0 %202
    %204 = vrot.lane.b32.xlu0 %v117, 64
    %v205 = vpop.permute.xlu0 %204
    %vm210 = vcmask 523264
    %v211 = vsel %vm210, %v162, %v199
    %v212 = vsel %vm210, %v163, %v201
    %v213 = vsel %vm210, %v164, %v203
    %v214 = vsel %vm210, %v165, %v205
    %v215 = vld [vmem:[#allocation2] sm:$0xff]
    %v216 = vld [vmem:[#allocation2 + $0x8] sm:$0xff]
    %v217 = vld [vmem:[#allocation2 + $0x10] sm:$0xff]
    %v218 = vld [vmem:[#allocation2 + $0x18] sm:$0xff]
    %v219 = vld [vmem:[#allocation2 + $0x20] sm:$0xff]
    %v220 = vld [vmem:[#allocation2 + $0x28] sm:$0xff]
    %v221 = vld [vmem:[#allocation2 + $0x30] sm:$0xff]
    %v222 = vld [vmem:[#allocation2 + $0x38] sm:$0xff]
    %v223 = vld [vmem:[#allocation2 + $0x40] sm:$0xff]
    %v224 = vld [vmem:[#allocation2 + $0x48] sm:$0xff]
    %v225 = vld [vmem:[#allocation2 + $0x50] sm:$0xff]
    %v226 = vld [vmem:[#allocation2 + $0x58] sm:$0xff]
    %v227 = vld [vmem:[#allocation2 + $0x60] sm:$0xff]
    %v228 = vld [vmem:[#allocation2 + $0x68] sm:$0xff]
    %v229 = vld [vmem:[#allocation2 + $0x70] sm:$0xff]
    %v230 = vld [vmem:[#allocation2 + $0x78] sm:$0xff]
    %v231 = vld [vmem:[#allocation2 + $0x80] sm:$0xff]
    %v232 = vld [vmem:[#allocation2 + $0x88] sm:$0xff]
    %v233 = vld [vmem:[#allocation2 + $0x90] sm:$0xff]
    %v234 = vld [vmem:[#allocation2 + $0x98] sm:$0xff]
    %v235 = vld [vmem:[#allocation2 + $0xa0] sm:$0xff]
    %v236 = vld [vmem:[#allocation2 + $0xa8] sm:$0xff]
    %v237 = vld [vmem:[#allocation2 + $0xb0] sm:$0xff]
    %v238 = vld [vmem:[#allocation2 + $0xb8] sm:$0xff]
    %v239 = vld [vmem:[%s3] sm:$0x1]
    %v241 = vlaneseq
    %v242 = vshrl.u32 %v241, 7
    %v243 = vsub.s32 0, %v242
    %v244 = vrot.slane %v239, %v243
    %v247 = vsel %vm210, %v190, 0
    %v250 = vsel %vm210, %v191, 0
    %v253 = vsel %vm210, %v192, 0
    %v256 = vsel %vm210, %v193, 0
    %258 = vmatprep.subr.mxu0 0.0
    %259 = vmatpush1.msra.mxu0 %v215
    %260 = vmatprep.subr.mxu0 0.0
    %261 = vmatpush1.msra.mxu0 %v216
    %262 = vmatprep.subr.mxu0 0.0
    %263 = vmatpush1.msra.mxu0 %v217
    %264 = vmatprep.subr.mxu0 0.0
    %265 = vmatpush1.msra.mxu0 %v218
    %266 = vmatprep.subr.mxu0 0.0
    %267 = vmatpush1.msra.mxu0 %v219
    %268 = vmatprep.subr.mxu0 0.0
    %269 = vmatpush1.msra.mxu0 %v220
    %270 = vmatprep.subr.mxu0 0.0
    %271 = vmatpush1.msra.mxu0 %v221
    %272 = vmatprep.subr.mxu0 0.0
    %273 = vmatpush1.msra.mxu0 %v222
    %274 = vmatprep.subr.mxu0 0.0
    %275 = vmatpush1.msra.mxu0 %v223
    %276 = vmatprep.subr.mxu0 0.0
    %277 = vmatpush1.msra.mxu0 %v224
    %278 = vmatprep.subr.mxu0 0.0
    %279 = vmatpush1.msra.mxu0 %v225
    %280 = vmatprep.subr.mxu0 0.0
    %281 = vmatpush1.msra.mxu0 %v226
    %282 = vmatprep.subr.mxu0 0.0
    %283 = vmatpush1.msra.mxu0 %v227
    %284 = vmatprep.subr.mxu0 0.0
    %285 = vmatpush1.msra.mxu0 %v228
    %286 = vmatprep.subr.mxu0 0.0
    %287 = vmatpush1.msra.mxu0 %v229
    %288 = vmatprep.subr.mxu0 0.0
    %289 = vmatpush1.msra.mxu0 %v230
    %290 = vmatprep.subr.mxu0 0.0
    %291 = vmatpush1.msra.mxu0 %v231
    %292 = vmatprep.subr.mxu0 0.0
    %293 = vmatpush1.msra.mxu0 %v232
    %294 = vmatprep.subr.mxu0 0.0
    %295 = vmatpush1.msra.mxu0 %v233
    %296 = vmatprep.subr.mxu0 0.0
    %297 = vmatpush1.msra.mxu0 %v234
    %298 = vmatprep.subr.mxu0 0.0
    %299 = vmatpush1.msra.mxu0 %v235
    %300 = vmatprep.subr.mxu0 0.0
    %301 = vmatpush1.msra.mxu0 %v236
    %302 = vmatprep.subr.mxu0 0.0
    %303 = vmatpush1.msra.mxu0 %v237
    %304 = vmatprep.subr.mxu0 0.0
    %305 = vmatpush1.msra.mxu0 %v238
    %306 = vmatprep.subr.mxu0 0.0
    %307 = vmatpush1.msra.mxu0 0.0
    %308 = vmatprep.subr.mxu0 0.0
    %309 = vmatpush1.msra.mxu0 0.0
    %310 = vmatprep.subr.mxu0 0.0
    %311 = vmatpush1.msra.mxu0 0.0
    %312 = vmatprep.subr.mxu0 0.0
    %313 = vmatpush1.msra.mxu0 0.0
    %314 = vmatprep.subr.mxu0 0.0
    %315 = vmatpush1.msra.mxu0 0.0
    %316 = vmatprep.subr.mxu0 0.0
    %317 = vmatpush1.msra.mxu0 0.0
    %318 = vmatprep.subr.mxu0 0.0
    %319 = vmatpush1.msra.mxu0 0.0
    %320 = vmatprep.subr.mxu0 0.0
    %321 = vmatpush1.msra.mxu0 0.0
    %322 = vmatprep.mubr.f32.mxu0 %v247
    %323 = vmatmul.mubr.f32.gmra.mrb[0].mxu0 %v211
    %v324 = vpop.f32.mrb[0].mxu0
    %v325 = vadd.f32 %v244, %v324
    %v326 = vpop.f32.mrb[0].mxu0
    %327 = vmatprep.mubr.f32.mxu0 %v250
    %328 = vmatmul.mubr.f32.gmra.mrb[0].mxu0 %v212
    %v329 = vpop.f32.mrb[0].mxu0
    %v330 = vadd.f32 %v244, %v329
    %v331 = vpop.f32.mrb[0].mxu0
    %332 = vmatprep.mubr.f32.mxu0 %v253
    %333 = vmatmul.mubr.f32.gmra.mrb[0].mxu0 %v213
    %v334 = vpop.f32.mrb[0].mxu0
    %v335 = vadd.f32 %v244, %v334
    %v336 = vpop.f32.mrb[0].mxu0
    %337 = vmatprep.mubr.f32.mxu0 %v256
    %338 = vmatmul.mubr.f32.gmra.mrb[0].mxu0 %v214
    %v339 = vpop.f32.mrb[0].mxu0
    %v340 = vadd.f32 %v244, %v339
    %v341 = vpop.f32.mrb[0].mxu0
    %342 = vdwg.mxu0
    %v343 = vsub.f32 0.0, %v325
    %v344 = vsub.f32 0.0, %v330
    %v345 = vsub.f32 0.0, %v335
    %v346 = vsub.f32 0.0, %v340
    %v347 = vmul.f32 %v343, 1.442695
    %v348 = vpow.pop %v347
    %v349 = vmul.f32 %v344, 1.442695
    %v350 = vpow.pop %v349
    %v351 = vmul.f32 %v345, 1.442695
    %v352 = vpow.pop %v351
    %v353 = vmul.f32 %v346, 1.442695
    %v354 = vpow.pop %v353
    %v355 = vadd.f32 %v348, 1.0
    %v356 = vadd.f32 %v350, 1.0
    %v357 = vadd.f32 %v352, 1.0
    %v358 = vadd.f32 %v354, 1.0
    %v359 = vrcp.pop %v355
    %v360 = vrcp.pop %v356
    %v361 = vrcp.pop %v357
    %v362 = vrcp.pop %v358
    %v363 = vmul.f32 %v325, %v359
    %v364 = vmul.f32 %v330, %v360
    %v365 = vmul.f32 %v335, %v361
    %v366 = vmul.f32 %v340, %v362
    %v367 = vrot.slane %v363, 7
    %v368 = vrot.slane %v364, 7
    %v369 = vrot.slane %v365, 7
    %v370 = vrot.slane %v366, 7
    %v371 = vsel %vm124, %v369, %v370
    %v372 = vsel %vm124, %v368, %v369
    %v373 = vsel %vm124, %v367, %v368
    %v374 = vsel %vm124, %v370, %v367
    %v375 = vrot.slane %v363, 1
    %v376 = vrot.slane %v364, 1
    %v377 = vrot.slane %v365, 1
    %v378 = vrot.slane %v366, 1
    %v379 = vsel %vm133, %v377, %v378
    %v380 = vsel %vm133, %v376, %v377
    %v381 = vsel %vm133, %v375, %v376
    %v382 = vsel %vm133, %v378, %v375
    %v383 = vsel %vm158, 0.0, %v374
    %v384 = vsel %vm159, 0.0, %v373
    %v385 = vsel %vm160, 0.0, %v372
    %v386 = vsel %vm161, 0.0, %v371
    %v387 = vsel %vm186, 0.0, %v381
    %v388 = vsel %vm187, 0.0, %v380
    %v389 = vsel %vm188, 0.0, %v379
    %v390 = vsel %vm189, 0.0, %v382
    %v391 = vld [vmem:[#allocation5] sm:$0xff]
    %v392 = vld [vmem:[#allocation5 + $0x8] sm:$0xff]
    %v393 = vld [vmem:[#allocation5 + $0x10] sm:$0xff]
    %v394 = vld [vmem:[#allocation5 + $0x18] sm:$0xff]
    %v395 = vld [vmem:[#allocation5 + $0x20] sm:$0xff]
    %v396 = vld [vmem:[#allocation5 + $0x28] sm:$0xff]
    %v397 = vld [vmem:[#allocation5 + $0x30] sm:$0xff]
    %v398 = vld [vmem:[#allocation5 + $0x38] sm:$0xff]
    %v399 = vld [vmem:[#allocation5 + $0x40] sm:$0xff]
    %v400 = vld [vmem:[#allocation5 + $0x48] sm:$0xff]
    %v401 = vld [vmem:[#allocation5 + $0x50] sm:$0xff]
    %v402 = vld [vmem:[#allocation5 + $0x58] sm:$0xff]
    %v403 = vld [vmem:[#allocation5 + $0x60] sm:$0xff]
    %v404 = vld [vmem:[#allocation5 + $0x68] sm:$0xff]
    %v405 = vld [vmem:[#allocation5 + $0x70] sm:$0xff]
    %v406 = vld [vmem:[#allocation5 + $0x78] sm:$0xff]
    %v407 = vld [vmem:[#allocation5 + $0x80] sm:$0xff]
    %v408 = vld [vmem:[#allocation5 + $0x88] sm:$0xff]
    %v409 = vld [vmem:[#allocation5 + $0x90] sm:$0xff]
    %v410 = vld [vmem:[#allocation5 + $0x98] sm:$0xff]
    %v411 = vld [vmem:[#allocation5 + $0xa0] sm:$0xff]
    %v412 = vld [vmem:[#allocation5 + $0xa8] sm:$0xff]
    %v413 = vld [vmem:[#allocation5 + $0xb0] sm:$0xff]
    %v414 = vld [vmem:[#allocation5 + $0xb8] sm:$0xff]
    %v415 = vld [vmem:[#allocation5 + $0xc0] sm:$0xff]
    %v416 = vld [vmem:[#allocation5 + $0xc8] sm:$0xff]
    %v417 = vld [vmem:[#allocation5 + $0xd0] sm:$0xff]
    %v418 = vld [vmem:[#allocation5 + $0xd8] sm:$0xff]
    %v419 = vld [vmem:[#allocation5 + $0xe0] sm:$0xff]
    %v420 = vld [vmem:[#allocation5 + $0xe8] sm:$0xff]
    %v421 = vld [vmem:[#allocation5 + $0xf0] sm:$0xff]
    %v422 = vld [vmem:[#allocation5 + $0xf8] sm:$0xff]
    %v423 = vld [vmem:[#allocation5 + $0x100] sm:$0xff]
    %v424 = vld [vmem:[#allocation5 + $0x108] sm:$0xff]
    %v425 = vld [vmem:[#allocation5 + $0x110] sm:$0xff]
    %v426 = vld [vmem:[#allocation5 + $0x118] sm:$0xff]
    %v427 = vld [vmem:[#allocation5 + $0x120] sm:$0xff]
    %v428 = vld [vmem:[#allocation5 + $0x128] sm:$0xff]
    %v429 = vld [vmem:[#allocation5 + $0x130] sm:$0xff]
    %v430 = vld [vmem:[#allocation5 + $0x138] sm:$0xff]
    %v431 = vld [vmem:[#allocation5 + $0x140] sm:$0xff]
    %v432 = vld [vmem:[#allocation5 + $0x148] sm:$0xff]
    %v433 = vld [vmem:[#allocation5 + $0x150] sm:$0xff]
    %v434 = vld [vmem:[#allocation5 + $0x158] sm:$0xff]
    %v435 = vld [vmem:[#allocation5 + $0x160] sm:$0xff]
    %v436 = vld [vmem:[#allocation5 + $0x168] sm:$0xff]
    %v437 = vld [vmem:[#allocation5 + $0x170] sm:$0xff]
    %v438 = vld [vmem:[#allocation5 + $0x178] sm:$0xff]
    %v439 = vld [vmem:[%s5] sm:$0x1]
    %v441 = vlaneseq
    %v442 = vshrl.u32 %v441, 7
    %v443 = vsub.s32 0, %v442
    %v444 = vrot.slane %v439, %v443
    %446 = vmatprep.subr.mxu0 0.0
    %447 = vmatpush1.msra.mxu0 %v391
    %448 = vmatprep.subr.mxu0 0.0
    %449 = vmatpush1.msra.mxu0 %v392
    %450 = vmatprep.subr.mxu0 0.0
    %451 = vmatpush1.msra.mxu0 %v393
    %452 = vmatprep.subr.mxu0 0.0
    %453 = vmatpush1.msra.mxu0 %v394
    %454 = vmatprep.subr.mxu0 0.0
    %455 = vmatpush1.msra.mxu0 %v395
    %456 = vmatprep.subr.mxu0 0.0
    %457 = vmatpush1.msra.mxu0 %v396
    %458 = vmatprep.subr.mxu0 0.0
    %459 = vmatpush1.msra.mxu0 %v397
    %460 = vmatprep.subr.mxu0 0.0
    %461 = vmatpush1.msra.mxu0 %v398
    %462 = vmatprep.subr.mxu0 0.0
    %463 = vmatpush1.msra.mxu0 %v399
    %464 = vmatprep.subr.mxu0 0.0
    %465 = vmatpush1.msra.mxu0 %v400
    %466 = vmatprep.subr.mxu0 0.0
    %467 = vmatpush1.msra.mxu0 %v401
    %468 = vmatprep.subr.mxu0 0.0
    %469 = vmatpush1.msra.mxu0 %v402
    %470 = vmatprep.subr.mxu0 0.0
    %471 = vmatpush1.msra.mxu0 %v403
    %472 = vmatprep.subr.mxu0 0.0
    %473 = vmatpush1.msra.mxu0 %v404
    %474 = vmatprep.subr.mxu0 0.0
    %475 = vmatpush1.msra.mxu0 %v405
    %476 = vmatprep.subr.mxu0 0.0
    %477 = vmatpush1.msra.mxu0 %v406
    %478 = vmatprep.subr.mxu0 0.0
    %479 = vmatpush1.msra.mxu0 %v407
    %480 = vmatprep.subr.mxu0 0.0
    %481 = vmatpush1.msra.mxu0 %v408
    %482 = vmatprep.subr.mxu0 0.0
    %483 = vmatpush1.msra.mxu0 %v409
    %484 = vmatprep.subr.mxu0 0.0
    %485 = vmatpush1.msra.mxu0 %v410
    %486 = vmatprep.subr.mxu0 0.0
    %487 = vmatpush1.msra.mxu0 %v411
    %488 = vmatprep.subr.mxu0 0.0
    %489 = vmatpush1.msra.mxu0 %v412
    %490 = vmatprep.subr.mxu0 0.0
    %491 = vmatpush1.msra.mxu0 %v413
    %492 = vmatprep.subr.mxu0 0.0
    %493 = vmatpush1.msra.mxu0 %v414
    %494 = vmatprep.subr.mxu0 0.0
    %495 = vmatpush1.msra.mxu0 %v415
    %496 = vmatprep.subr.mxu0 0.0
    %497 = vmatpush1.msra.mxu0 %v416
    %498 = vmatprep.subr.mxu0 0.0
    %499 = vmatpush1.msra.mxu0 %v417
    %500 = vmatprep.subr.mxu0 0.0
    %501 = vmatpush1.msra.mxu0 %v418
    %502 = vmatprep.subr.mxu0 0.0
    %503 = vmatpush1.msra.mxu0 %v419
    %504 = vmatprep.subr.mxu0 0.0
    %505 = vmatpush1.msra.mxu0 %v420
    %506 = vmatprep.subr.mxu0 0.0
    %507 = vmatpush1.msra.mxu0 %v421
    %508 = vmatprep.subr.mxu0 0.0
    %509 = vmatpush1.msra.mxu0 %v422
    %510 = vmatprep.mubr.f32.mxu0 %v363
    %511 = vmatmul.mubr.f32.gmra.mrb[0].mxu0 %v383
    %v512 = vpop.f32.mrb[0].mxu0
    %v513 = vadd.f32 %v444, %v512
    %v514 = vpop.f32.mrb[0].mxu0
    %515 = vmatprep.mubr.f32.mxu0 %v364
    %516 = vmatmul.mubr.f32.gmra.mrb[0].mxu0 %v384
    %v517 = vpop.f32.mrb[0].mxu0
    %v518 = vadd.f32 %v444, %v517
    %v519 = vpop.f32.mrb[0].mxu0
    %520 = vmatprep.mubr.f32.mxu0 %v365
    %521 = vmatmul.mubr.f32.gmra.mrb[0].mxu0 %v385
    %v522 = vpop.f32.mrb[0].mxu0
    %v523 = vadd.f32 %v444, %v522
    %v524 = vpop.f32.mrb[0].mxu0
    %525 = vmatprep.mubr.f32.mxu0 %v366
    %526 = vmatmul.mubr.f32.gmra.mrb[0].mxu0 %v386
    %v527 = vpop.f32.mrb[0].mxu0
    %v528 = vadd.f32 %v444, %v527
    %v529 = vpop.f32.mrb[0].mxu0
    %530 = vdwg.mxu0
    %531 = vmatprep.subr.mxu0 0.0
    %532 = vmatpush1.msra.mxu0 %v423
    %533 = vmatprep.subr.mxu0 0.0
    %534 = vmatpush1.msra.mxu0 %v424
    %535 = vmatprep.subr.mxu0 0.0
    %536 = vmatpush1.msra.mxu0 %v425
    %537 = vmatprep.subr.mxu0 0.0
    %538 = vmatpush1.msra.mxu0 %v426
    %539 = vmatprep.subr.mxu0 0.0
    %540 = vmatpush1.msra.mxu0 %v427
    %541 = vmatprep.subr.mxu0 0.0
    %542 = vmatpush1.msra.mxu0 %v428
    %543 = vmatprep.subr.mxu0 0.0
    %544 = vmatpush1.msra.mxu0 %v429
    %545 = vmatprep.subr.mxu0 0.0
    %546 = vmatpush1.msra.mxu0 %v430
    %547 = vmatprep.subr.mxu0 0.0
    %548 = vmatpush1.msra.mxu0 %v431
    %549 = vmatprep.subr.mxu0 0.0
    %550 = vmatpush1.msra.mxu0 %v432
    %551 = vmatprep.subr.mxu0 0.0
    %552 = vmatpush1.msra.mxu0 %v433
    %553 = vmatprep.subr.mxu0 0.0
    %554 = vmatpush1.msra.mxu0 %v434
    %555 = vmatprep.subr.mxu0 0.0
    %556 = vmatpush1.msra.mxu0 %v435
    %557 = vmatprep.subr.mxu0 0.0
    %558 = vmatpush1.msra.mxu0 %v436
    %559 = vmatprep.subr.mxu0 0.0
    %560 = vmatpush1.msra.mxu0 %v437
    %561 = vmatprep.subr.mxu0 0.0
    %562 = vmatpush1.msra.mxu0 %v438
    %563 = vmatprep.subr.mxu0 0.0
    %564 = vmatpush1.msra.mxu0 0.0
    %565 = vmatprep.subr.mxu0 0.0
    %566 = vmatpush1.msra.mxu0 0.0
    %567 = vmatprep.subr.mxu0 0.0
    %568 = vmatpush1.msra.mxu0 0.0
    %569 = vmatprep.subr.mxu0 0.0
    %570 = vmatpush1.msra.mxu0 0.0
    %571 = vmatprep.subr.mxu0 0.0
    %572 = vmatpush1.msra.mxu0 0.0
    %573 = vmatprep.subr.mxu0 0.0
    %574 = vmatpush1.msra.mxu0 0.0
    %575 = vmatprep.subr.mxu0 0.0
    %576 = vmatpush1.msra.mxu0 0.0
    %577 = vmatprep.subr.mxu0 0.0
    %578 = vmatpush1.msra.mxu0 0.0
    %579 = vmatprep.subr.mxu0 0.0
    %580 = vmatpush1.msra.mxu0 0.0
    %581 = vmatprep.subr.mxu0 0.0
    %582 = vmatpush1.msra.mxu0 0.0
    %583 = vmatprep.subr.mxu0 0.0
    %584 = vmatpush1.msra.mxu0 0.0
    %585 = vmatprep.subr.mxu0 0.0
    %586 = vmatpush1.msra.mxu0 0.0
    %587 = vmatprep.subr.mxu0 0.0
    %588 = vmatpush1.msra.mxu0 0.0
    %589 = vmatprep.subr.mxu0 0.0
    %590 = vmatpush1.msra.mxu0 0.0
    %591 = vmatprep.subr.mxu0 0.0
    %592 = vmatpush1.msra.mxu0 0.0
    %593 = vmatprep.subr.mxu0 0.0
    %594 = vmatpush1.msra.mxu0 0.0
    %595 = vmatprep.mubr.f32.mxu0 0.0
    %596 = vmatmul.mubr.f32.gmra.mrb[0].mxu0 %v387
    %v597 = vpop.f32.mrb[0].mxu0
    %v598 = vadd.f32 %v513, %v597
    %v599 = vpop.f32.mrb[0].mxu0
    %600 = vmatprep.mubr.f32.mxu0 0.0
    %601 = vmatmul.mubr.f32.gmra.mrb[0].mxu0 %v388
    %v602 = vpop.f32.mrb[0].mxu0
    %v603 = vadd.f32 %v518, %v602
    %v604 = vpop.f32.mrb[0].mxu0
    %605 = vmatprep.mubr.f32.mxu0 0.0
    %606 = vmatmul.mubr.f32.gmra.mrb[0].mxu0 %v389
    %v607 = vpop.f32.mrb[0].mxu0
    %v608 = vadd.f32 %v523, %v607
    %v609 = vpop.f32.mrb[0].mxu0
    %610 = vmatprep.mubr.f32.mxu0 0.0
    %611 = vmatmul.mubr.f32.gmra.mrb[0].mxu0 %v390
    %v612 = vpop.f32.mrb[0].mxu0
    %v613 = vadd.f32 %v528, %v612
    %v614 = vpop.f32.mrb[0].mxu0
    %615 = vdwg.mxu0
    %v616 = vsub.f32 0.0, %v598
    %v617 = vsub.f32 0.0, %v603
    %v618 = vsub.f32 0.0, %v608
    %v619 = vsub.f32 0.0, %v613
    %v620 = vmul.f32 %v616, 1.442695
    %v621 = vpow.pop %v620
    %v622 = vmul.f32 %v617, 1.442695
    %v623 = vpow.pop %v622
    %v624 = vmul.f32 %v618, 1.442695
    %v625 = vpow.pop %v624
    %v626 = vmul.f32 %v619, 1.442695
    %v627 = vpow.pop %v626
    %v628 = vadd.f32 %v621, 1.0
    %v629 = vadd.f32 %v623, 1.0
    %v630 = vadd.f32 %v625, 1.0
    %v631 = vadd.f32 %v627, 1.0
    %v632 = vrcp.pop %v628
    %v633 = vrcp.pop %v629
    %v634 = vrcp.pop %v630
    %v635 = vrcp.pop %v631
    %v636 = vmul.f32 %v598, %v632
    %v637 = vmul.f32 %v603, %v633
    %v638 = vmul.f32 %v608, %v634
    %v639 = vmul.f32 %v613, %v635
    %v640 = vrot.slane %v636, 6
    %v641 = vrot.slane %v637, 6
    %v642 = vrot.slane %v638, 6
    %v643 = vrot.slane %v639, 6
    %vm644 = vcmp.lt.s32.totalorder %v123, 2
    %v645 = vsel %vm644, %v642, %v643
    %v646 = vsel %vm644, %v641, %v642
    %v647 = vsel %vm644, %v640, %v641
    %v648 = vsel %vm644, %v643, %v640
    %v649 = vrot.slane %v636, 2
    %v650 = vrot.slane %v637, 2
    %v651 = vrot.slane %v638, 2
    %v652 = vrot.slane %v639, 2
    %vm653 = vcmp.lt.s32.totalorder %v123, 6
    %v654 = vsel %vm653, %v651, %v652
    %v655 = vsel %vm653, %v650, %v651
    %v656 = vsel %vm653, %v649, %v650
    %v657 = vsel %vm653, %v652, %v649
    %vm658 = vcmp.lt.s32.totalorder %v110, 2
    %vm659 = vcmp.lt.s32.totalorder %v111, 2
    %vm660 = vcmp.lt.s32.totalorder %v112, 2
    %vm661 = vcmp.lt.s32.totalorder %v113, 2
    %v662 = vsel %vm658, 1, 0
    %v663 = vsel %vm659, 1, 0
    %v664 = vsel %vm660, 1, 0
    %v665 = vsel %vm661, 1, 0
    %666 = vset.pattern.permute.xlu0 0
    %667 = vperm.xlu0 %666, %v662
    %v668 = vpop.permute.xlu0 %667
    %669 = vset.pattern.permute.xlu0 0
    %670 = vperm.xlu0 %669, %v663
    %v671 = vpop.permute.xlu0 %670
    %672 = vset.pattern.permute.xlu0 0
    %673 = vperm.xlu0 %672, %v664
    %v674 = vpop.permute.xlu0 %673
    %675 = vset.pattern.permute.xlu0 0
    %676 = vperm.xlu0 %675, %v665
    %v677 = vpop.permute.xlu0 %676
    %vm678 = vcmp.eq.s32.totalorder %v668, 1
    %vm679 = vcmp.eq.s32.totalorder %v671, 1
    %vm680 = vcmp.eq.s32.totalorder %v674, 1
    %vm681 = vcmp.eq.s32.totalorder %v677, 1
    %v682 = vsel %vm678, 0.0, %v648
    %v683 = vsel %vm679, 0.0, %v647
    %v684 = vsel %vm680, 0.0, %v646
    %v685 = vsel %vm681, 0.0, %v645
    %vm686 = vcmp.ge.s32.totalorder %v110, 14
    %vm687 = vcmp.ge.s32.totalorder %v111, 14
    %vm688 = vcmp.ge.s32.totalorder %v112, 14
    %vm689 = vcmp.ge.s32.totalorder %v113, 14
    %v690 = vsel %vm686, 1, 0
    %v691 = vsel %vm687, 1, 0
    %v692 = vsel %vm688, 1, 0
    %v693 = vsel %vm689, 1, 0
    %694 = vset.pattern.permute.xlu0 0
    %695 = vperm.xlu0 %694, %v690
    %v696 = vpop.permute.xlu0 %695
    %697 = vset.pattern.permute.xlu0 0
    %698 = vperm.xlu0 %697, %v691
    %v699 = vpop.permute.xlu0 %698
    %700 = vset.pattern.permute.xlu0 0
    %701 = vperm.xlu0 %700, %v692
    %v702 = vpop.permute.xlu0 %701
    %703 = vset.pattern.permute.xlu0 0
    %704 = vperm.xlu0 %703, %v693
    %v705 = vpop.permute.xlu0 %704
    %vm706 = vcmp.eq.s32.totalorder %v696, 1
    %vm707 = vcmp.eq.s32.totalorder %v699, 1
    %vm708 = vcmp.eq.s32.totalorder %v702, 1
    %vm709 = vcmp.eq.s32.totalorder %v705, 1
    %v710 = vsel %vm706, 0.0, %v656
    %v711 = vsel %vm707, 0.0, %v655
    %v712 = vsel %vm708, 0.0, %v654
    %v713 = vsel %vm709, 0.0, %v657
    %v714 = vld [vmem:[#allocation7] sm:$0xff]
    %v715 = vld [vmem:[#allocation7 + $0x8] sm:$0xff]
    %v716 = vld [vmem:[#allocation7 + $0x10] sm:$0xff]
    %v717 = vld [vmem:[#allocation7 + $0x18] sm:$0xff]
    %v718 = vld [vmem:[#allocation7 + $0x20] sm:$0xff]
    %v719 = vld [vmem:[#allocation7 + $0x28] sm:$0xff]
    %v720 = vld [vmem:[#allocation7 + $0x30] sm:$0xff]
    %v721 = vld [vmem:[#allocation7 + $0x38] sm:$0xff]
    %v722 = vld [vmem:[#allocation7 + $0x40] sm:$0xff]
    %v723 = vld [vmem:[#allocation7 + $0x48] sm:$0xff]
    %v724 = vld [vmem:[#allocation7 + $0x50] sm:$0xff]
    %v725 = vld [vmem:[#allocation7 + $0x58] sm:$0xff]
    %v726 = vld [vmem:[#allocation7 + $0x60] sm:$0xff]
    %v727 = vld [vmem:[#allocation7 + $0x68] sm:$0xff]
    %v728 = vld [vmem:[#allocation7 + $0x70] sm:$0xff]
    %v729 = vld [vmem:[#allocation7 + $0x78] sm:$0xff]
    %v730 = vld [vmem:[#allocation7 + $0x80] sm:$0xff]
    %v731 = vld [vmem:[#allocation7 + $0x88] sm:$0xff]
    %v732 = vld [vmem:[#allocation7 + $0x90] sm:$0xff]
    %v733 = vld [vmem:[#allocation7 + $0x98] sm:$0xff]
    %v734 = vld [vmem:[#allocation7 + $0xa0] sm:$0xff]
    %v735 = vld [vmem:[#allocation7 + $0xa8] sm:$0xff]
    %v736 = vld [vmem:[#allocation7 + $0xb0] sm:$0xff]
    %v737 = vld [vmem:[#allocation7 + $0xb8] sm:$0xff]
    %v738 = vld [vmem:[#allocation7 + $0xc0] sm:$0xff]
    %v739 = vld [vmem:[#allocation7 + $0xc8] sm:$0xff]
    %v740 = vld [vmem:[#allocation7 + $0xd0] sm:$0xff]
    %v741 = vld [vmem:[#allocation7 + $0xd8] sm:$0xff]
    %v742 = vld [vmem:[#allocation7 + $0xe0] sm:$0xff]
    %v743 = vld [vmem:[#allocation7 + $0xe8] sm:$0xff]
    %v744 = vld [vmem:[#allocation7 + $0xf0] sm:$0xff]
    %v745 = vld [vmem:[#allocation7 + $0xf8] sm:$0xff]
    %v746 = vld [vmem:[#allocation7 + $0x100] sm:$0xff]
    %v747 = vld [vmem:[#allocation7 + $0x108] sm:$0xff]
    %v748 = vld [vmem:[#allocation7 + $0x110] sm:$0xff]
    %v749 = vld [vmem:[#allocation7 + $0x118] sm:$0xff]
    %v750 = vld [vmem:[#allocation7 + $0x120] sm:$0xff]
    %v751 = vld [vmem:[#allocation7 + $0x128] sm:$0xff]
    %v752 = vld [vmem:[#allocation7 + $0x130] sm:$0xff]
    %v753 = vld [vmem:[#allocation7 + $0x138] sm:$0xff]
    %v754 = vld [vmem:[#allocation7 + $0x140] sm:$0xff]
    %v755 = vld [vmem:[#allocation7 + $0x148] sm:$0xff]
    %v756 = vld [vmem:[#allocation7 + $0x150] sm:$0xff]
    %v757 = vld [vmem:[#allocation7 + $0x158] sm:$0xff]
    %v758 = vld [vmem:[#allocation7 + $0x160] sm:$0xff]
    %v759 = vld [vmem:[#allocation7 + $0x168] sm:$0xff]
    %v760 = vld [vmem:[#allocation7 + $0x170] sm:$0xff]
    %v761 = vld [vmem:[#allocation7 + $0x178] sm:$0xff]
    %v762 = vld [vmem:[%s7] sm:$0x1]
    %v764 = vlaneseq
    %v765 = vshrl.u32 %v764, 7
    %v766 = vsub.s32 0, %v765
    %v767 = vrot.slane %v762, %v766
    %769 = vmatprep.subr.mxu0 0.0
    %770 = vmatpush1.msra.mxu0 %v714
    %771 = vmatprep.subr.mxu0 0.0
    %772 = vmatpush1.msra.mxu0 %v715
    %773 = vmatprep.subr.mxu0 0.0
    %774 = vmatpush1.msra.mxu0 %v716
    %775 = vmatprep.subr.mxu0 0.0
    %776 = vmatpush1.msra.mxu0 %v717
    %777 = vmatprep.subr.mxu0 0.0
    %778 = vmatpush1.msra.mxu0 %v718
    %779 = vmatprep.subr.mxu0 0.0
    %780 = vmatpush1.msra.mxu0 %v719
    %781 = vmatprep.subr.mxu0 0.0
    %782 = vmatpush1.msra.mxu0 %v720
    %783 = vmatprep.subr.mxu0 0.0
    %784 = vmatpush1.msra.mxu0 %v721
    %785 = vmatprep.subr.mxu0 0.0
    %786 = vmatpush1.msra.mxu0 %v722
    %787 = vmatprep.subr.mxu0 0.0
    %788 = vmatpush1.msra.mxu0 %v723
    %789 = vmatprep.subr.mxu0 0.0
    %790 = vmatpush1.msra.mxu0 %v724
    %791 = vmatprep.subr.mxu0 0.0
    %792 = vmatpush1.msra.mxu0 %v725
    %793 = vmatprep.subr.mxu0 0.0
    %794 = vmatpush1.msra.mxu0 %v726
    %795 = vmatprep.subr.mxu0 0.0
    %796 = vmatpush1.msra.mxu0 %v727
    %797 = vmatprep.subr.mxu0 0.0
    %798 = vmatpush1.msra.mxu0 %v728
    %799 = vmatprep.subr.mxu0 0.0
    %800 = vmatpush1.msra.mxu0 %v729
    %801 = vmatprep.subr.mxu0 0.0
    %802 = vmatpush1.msra.mxu0 %v730
    %803 = vmatprep.subr.mxu0 0.0
    %804 = vmatpush1.msra.mxu0 %v731
    %805 = vmatprep.subr.mxu0 0.0
    %806 = vmatpush1.msra.mxu0 %v732
    %807 = vmatprep.subr.mxu0 0.0
    %808 = vmatpush1.msra.mxu0 %v733
    %809 = vmatprep.subr.mxu0 0.0
    %810 = vmatpush1.msra.mxu0 %v734
    %811 = vmatprep.subr.mxu0 0.0
    %812 = vmatpush1.msra.mxu0 %v735
    %813 = vmatprep.subr.mxu0 0.0
    %814 = vmatpush1.msra.mxu0 %v736
    %815 = vmatprep.subr.mxu0 0.0
    %816 = vmatpush1.msra.mxu0 %v737
    %817 = vmatprep.subr.mxu0 0.0
    %818 = vmatpush1.msra.mxu0 %v738
    %819 = vmatprep.subr.mxu0 0.0
    %820 = vmatpush1.msra.mxu0 %v739
    %821 = vmatprep.subr.mxu0 0.0
    %822 = vmatpush1.msra.mxu0 %v740
    %823 = vmatprep.subr.mxu0 0.0
    %824 = vmatpush1.msra.mxu0 %v741
    %825 = vmatprep.subr.mxu0 0.0
    %826 = vmatpush1.msra.mxu0 %v742
    %827 = vmatprep.subr.mxu0 0.0
    %828 = vmatpush1.msra.mxu0 %v743
    %829 = vmatprep.subr.mxu0 0.0
    %830 = vmatpush1.msra.mxu0 %v744
    %831 = vmatprep.subr.mxu0 0.0
    %832 = vmatpush1.msra.mxu0 %v745
    %833 = vmatprep.mubr.f32.mxu0 %v636
    %834 = vmatmul.mubr.f32.gmra.mrb[0].mxu0 %v682
    %v835 = vpop.f32.mrb[0].mxu0
    %v836 = vadd.f32 %v767, %v835
    %v837 = vpop.f32.mrb[0].mxu0
    %838 = vmatprep.mubr.f32.mxu0 %v637
    %839 = vmatmul.mubr.f32.gmra.mrb[0].mxu0 %v683
    %v840 = vpop.f32.mrb[0].mxu0
    %v841 = vadd.f32 %v767, %v840
    %v842 = vpop.f32.mrb[0].mxu0
    %843 = vmatprep.mubr.f32.mxu0 %v638
    %844 = vmatmul.mubr.f32.gmra.mrb[0].mxu0 %v684
    %v845 = vpop.f32.mrb[0].mxu0
    %v846 = vadd.f32 %v767, %v845
    %v847 = vpop.f32.mrb[0].mxu0
    %848 = vmatprep.mubr.f32.mxu0 %v639
    %849 = vmatmul.mubr.f32.gmra.mrb[0].mxu0 %v685
    %v850 = vpop.f32.mrb[0].mxu0
    %v851 = vadd.f32 %v767, %v850
    %v852 = vpop.f32.mrb[0].mxu0
    %853 = vdwg.mxu0
    %854 = vmatprep.subr.mxu0 0.0
    %855 = vmatpush1.msra.mxu0 %v746
    %856 = vmatprep.subr.mxu0 0.0
    %857 = vmatpush1.msra.mxu0 %v747
    %858 = vmatprep.subr.mxu0 0.0
    %859 = vmatpush1.msra.mxu0 %v748
    %860 = vmatprep.subr.mxu0 0.0
    %861 = vmatpush1.msra.mxu0 %v749
    %862 = vmatprep.subr.mxu0 0.0
    %863 = vmatpush1.msra.mxu0 %v750
    %864 = vmatprep.subr.mxu0 0.0
    %865 = vmatpush1.msra.mxu0 %v751
    %866 = vmatprep.subr.mxu0 0.0
    %867 = vmatpush1.msra.mxu0 %v752
    %868 = vmatprep.subr.mxu0 0.0
    %869 = vmatpush1.msra.mxu0 %v753
    %870 = vmatprep.subr.mxu0 0.0
    %871 = vmatpush1.msra.mxu0 %v754
    %872 = vmatprep.subr.mxu0 0.0
    %873 = vmatpush1.msra.mxu0 %v755
    %874 = vmatprep.subr.mxu0 0.0
    %875 = vmatpush1.msra.mxu0 %v756
    %876 = vmatprep.subr.mxu0 0.0
    %877 = vmatpush1.msra.mxu0 %v757
    %878 = vmatprep.subr.mxu0 0.0
    %879 = vmatpush1.msra.mxu0 %v758
    %880 = vmatprep.subr.mxu0 0.0
    %881 = vmatpush1.msra.mxu0 %v759
    %882 = vmatprep.subr.mxu0 0.0
    %883 = vmatpush1.msra.mxu0 %v760
    %884 = vmatprep.subr.mxu0 0.0
    %885 = vmatpush1.msra.mxu0 %v761
    %886 = vmatprep.subr.mxu0 0.0
    %887 = vmatpush1.msra.mxu0 0.0
    %888 = vmatprep.subr.mxu0 0.0
    %889 = vmatpush1.msra.mxu0 0.0
    %890 = vmatprep.subr.mxu0 0.0
    %891 = vmatpush1.msra.mxu0 0.0
    %892 = vmatprep.subr.mxu0 0.0
    %893 = vmatpush1.msra.mxu0 0.0
    %894 = vmatprep.subr.mxu0 0.0
    %895 = vmatpush1.msra.mxu0 0.0
    %896 = vmatprep.subr.mxu0 0.0
    %897 = vmatpush1.msra.mxu0 0.0
    %898 = vmatprep.subr.mxu0 0.0
    %899 = vmatpush1.msra.mxu0 0.0
    %900 = vmatprep.subr.mxu0 0.0
    %901 = vmatpush1.msra.mxu0 0.0
    %902 = vmatprep.subr.mxu0 0.0
    %903 = vmatpush1.msra.mxu0 0.0
    %904 = vmatprep.subr.mxu0 0.0
    %905 = vmatpush1.msra.mxu0 0.0
    %906 = vmatprep.subr.mxu0 0.0
    %907 = vmatpush1.msra.mxu0 0.0
    %908 = vmatprep.subr.mxu0 0.0
    %909 = vmatpush1.msra.mxu0 0.0
    %910 = vmatprep.subr.mxu0 0.0
    %911 = vmatpush1.msra.mxu0 0.0
    %912 = vmatprep.subr.mxu0 0.0
    %913 = vmatpush1.msra.mxu0 0.0
    %914 = vmatprep.subr.mxu0 0.0
    %915 = vmatpush1.msra.mxu0 0.0
    %916 = vmatprep.subr.mxu0 0.0
    %917 = vmatpush1.msra.mxu0 0.0
    %918 = vmatprep.mubr.f32.mxu0 0.0
    %919 = vmatmul.mubr.f32.gmra.mrb[0].mxu0 %v710
    %v920 = vpop.f32.mrb[0].mxu0
    %v921 = vadd.f32 %v836, %v920
    %v922 = vpop.f32.mrb[0].mxu0
    %923 = vmatprep.mubr.f32.mxu0 0.0
    %924 = vmatmul.mubr.f32.gmra.mrb[0].mxu0 %v711
    %v925 = vpop.f32.mrb[0].mxu0
    %v926 = vadd.f32 %v841, %v925
    %v927 = vpop.f32.mrb[0].mxu0
    %928 = vmatprep.mubr.f32.mxu0 0.0
    %929 = vmatmul.mubr.f32.gmra.mrb[0].mxu0 %v712
    %v930 = vpop.f32.mrb[0].mxu0
    %v931 = vadd.f32 %v846, %v930
    %v932 = vpop.f32.mrb[0].mxu0
    %933 = vmatprep.mubr.f32.mxu0 0.0
    %934 = vmatmul.mubr.f32.gmra.mrb[0].mxu0 %v713
    %v935 = vpop.f32.mrb[0].mxu0
    %v936 = vadd.f32 %v851, %v935
    %v937 = vpop.f32.mrb[0].mxu0
    %938 = vdwg.mxu0
    %v939 = vsub.f32 0.0, %v921
    %v940 = vsub.f32 0.0, %v926
    %v941 = vsub.f32 0.0, %v931
    %v942 = vsub.f32 0.0, %v936
    %v943 = vmul.f32 %v939, 1.442695
    %v944 = vpow.pop %v943
    %v945 = vmul.f32 %v940, 1.442695
    %v946 = vpow.pop %v945
    %v947 = vmul.f32 %v941, 1.442695
    %v948 = vpow.pop %v947
    %v949 = vmul.f32 %v942, 1.442695
    %v950 = vpow.pop %v949
    %v951 = vadd.f32 %v944, 1.0
    %v952 = vadd.f32 %v946, 1.0
    %v953 = vadd.f32 %v948, 1.0
    %v954 = vadd.f32 %v950, 1.0
    %v955 = vrcp.pop %v951
    %v956 = vrcp.pop %v952
    %v957 = vrcp.pop %v953
    %v958 = vrcp.pop %v954
    %v959 = vmul.f32 %v921, %v955
    %v960 = vmul.f32 %v926, %v956
    %v961 = vmul.f32 %v931, %v957
    %v962 = vmul.f32 %v936, %v958
    %v963 = vrot.slane %v959, 4
    %v964 = vrot.slane %v960, 4
    %v965 = vrot.slane %v961, 4
    %v966 = vrot.slane %v962, 4
    %vm967 = vcmp.lt.s32.totalorder %v123, 4
    %v968 = vsel %vm967, %v965, %v966
    %v969 = vsel %vm967, %v964, %v965
    %v970 = vsel %vm967, %v963, %v964
    %v971 = vsel %vm967, %v966, %v963
    %vm972 = vcmp.lt.s32.totalorder %v110, 4
    %vm973 = vcmp.lt.s32.totalorder %v111, 4
    %vm974 = vcmp.lt.s32.totalorder %v112, 4
    %vm975 = vcmp.lt.s32.totalorder %v113, 4
    %v976 = vsel %vm972, 1, 0
    %v977 = vsel %vm973, 1, 0
    %v978 = vsel %vm974, 1, 0
    %v979 = vsel %vm975, 1, 0
    %980 = vset.pattern.permute.xlu0 0
    %981 = vperm.xlu0 %980, %v976
    %v982 = vpop.permute.xlu0 %981
    %983 = vset.pattern.permute.xlu0 0
    %984 = vperm.xlu0 %983, %v977
    %v985 = vpop.permute.xlu0 %984
    %986 = vset.pattern.permute.xlu0 0
    %987 = vperm.xlu0 %986, %v978
    %v988 = vpop.permute.xlu0 %987
    %989 = vset.pattern.permute.xlu0 0
    %990 = vperm.xlu0 %989, %v979
    %v991 = vpop.permute.xlu0 %990
    %vm992 = vcmp.eq.s32.totalorder %v982, 1
    %vm993 = vcmp.eq.s32.totalorder %v985, 1
    %vm994 = vcmp.eq.s32.totalorder %v988, 1
    %vm995 = vcmp.eq.s32.totalorder %v991, 1
    %v996 = vsel %vm992, 0.0, %v971
    %v997 = vsel %vm993, 0.0, %v970
    %v998 = vsel %vm994, 0.0, %v969
    %v999 = vsel %vm995, 0.0, %v968
    %vm1000 = vcmp.ge.s32.totalorder %v110, 12
    %vm1001 = vcmp.ge.s32.totalorder %v111, 12
    %vm1002 = vcmp.ge.s32.totalorder %v112, 12
    %vm1003 = vcmp.ge.s32.totalorder %v113, 12
    %v1004 = vsel %vm1000, 1, 0
    %v1005 = vsel %vm1001, 1, 0
    %v1006 = vsel %vm1002, 1, 0
    %v1007 = vsel %vm1003, 1, 0
    %1008 = vset.pattern.permute.xlu0 0
    %1009 = vperm.xlu0 %1008, %v1004
    %v1010 = vpop.permute.xlu0 %1009
    %1011 = vset.pattern.permute.xlu0 0
    %1012 = vperm.xlu0 %1011, %v1005
    %v1013 = vpop.permute.xlu0 %1012
    %1014 = vset.pattern.permute.xlu0 0
    %1015 = vperm.xlu0 %1014, %v1006
    %v1016 = vpop.permute.xlu0 %1015
    %1017 = vset.pattern.permute.xlu0 0
    %1018 = vperm.xlu0 %1017, %v1007
    %v1019 = vpop.permute.xlu0 %1018
    %vm1020 = vcmp.eq.s32.totalorder %v1010, 1
    %vm1021 = vcmp.eq.s32.totalorder %v1013, 1
    %vm1022 = vcmp.eq.s32.totalorder %v1016, 1
    %vm1023 = vcmp.eq.s32.totalorder %v1019, 1
    %v1024 = vsel %vm1020, 0.0, %v970
    %v1025 = vsel %vm1021, 0.0, %v969
    %v1026 = vsel %vm1022, 0.0, %v968
    %v1027 = vsel %vm1023, 0.0, %v971
    %v1028 = vld [vmem:[#allocation8] sm:$0xff]
    %v1029 = vld [vmem:[#allocation8 + $0x8] sm:$0xff]
    %v1030 = vld [vmem:[#allocation8 + $0x10] sm:$0xff]
    %v1031 = vld [vmem:[#allocation8 + $0x18] sm:$0xff]
    %v1032 = vld [vmem:[#allocation8 + $0x20] sm:$0xff]
    %v1033 = vld [vmem:[#allocation8 + $0x28] sm:$0xff]
    %v1034 = vld [vmem:[#allocation8 + $0x30] sm:$0xff]
    %v1035 = vld [vmem:[#allocation8 + $0x38] sm:$0xff]
    %v1036 = vld [vmem:[#allocation8 + $0x40] sm:$0xff]
    %v1037 = vld [vmem:[#allocation8 + $0x48] sm:$0xff]
    %v1038 = vld [vmem:[#allocation8 + $0x50] sm:$0xff]
    %v1039 = vld [vmem:[#allocation8 + $0x58] sm:$0xff]
    %v1040 = vld [vmem:[#allocation8 + $0x60] sm:$0xff]
    %v1041 = vld [vmem:[#allocation8 + $0x68] sm:$0xff]
    %v1042 = vld [vmem:[#allocation8 + $0x70] sm:$0xff]
    %v1043 = vld [vmem:[#allocation8 + $0x78] sm:$0xff]
    %v1044 = vld [vmem:[#allocation8 + $0x80] sm:$0xff]
    %v1045 = vld [vmem:[#allocation8 + $0x88] sm:$0xff]
    %v1046 = vld [vmem:[#allocation8 + $0x90] sm:$0xff]
    %v1047 = vld [vmem:[#allocation8 + $0x98] sm:$0xff]
    %v1048 = vld [vmem:[#allocation8 + $0xa0] sm:$0xff]
    %v1049 = vld [vmem:[#allocation8 + $0xa8] sm:$0xff]
    %v1050 = vld [vmem:[#allocation8 + $0xb0] sm:$0xff]
    %v1051 = vld [vmem:[#allocation8 + $0xb8] sm:$0xff]
    %v1052 = vld [vmem:[#allocation8 + $0xc0] sm:$0xff]
    %v1053 = vld [vmem:[#allocation8 + $0xc8] sm:$0xff]
    %v1054 = vld [vmem:[#allocation8 + $0xd0] sm:$0xff]
    %v1055 = vld [vmem:[#allocation8 + $0xd8] sm:$0xff]
    %v1056 = vld [vmem:[#allocation8 + $0xe0] sm:$0xff]
    %v1057 = vld [vmem:[#allocation8 + $0xe8] sm:$0xff]
    %v1058 = vld [vmem:[#allocation8 + $0xf0] sm:$0xff]
    %v1059 = vld [vmem:[#allocation8 + $0xf8] sm:$0xff]
    %v1060 = vld [vmem:[#allocation8 + $0x100] sm:$0xff]
    %v1061 = vld [vmem:[#allocation8 + $0x108] sm:$0xff]
    %v1062 = vld [vmem:[#allocation8 + $0x110] sm:$0xff]
    %v1063 = vld [vmem:[#allocation8 + $0x118] sm:$0xff]
    %v1064 = vld [vmem:[#allocation8 + $0x120] sm:$0xff]
    %v1065 = vld [vmem:[#allocation8 + $0x128] sm:$0xff]
    %v1066 = vld [vmem:[#allocation8 + $0x130] sm:$0xff]
    %v1067 = vld [vmem:[#allocation8 + $0x138] sm:$0xff]
    %v1068 = vld [vmem:[#allocation8 + $0x140] sm:$0xff]
    %v1069 = vld [vmem:[#allocation8 + $0x148] sm:$0xff]
    %v1070 = vld [vmem:[#allocation8 + $0x150] sm:$0xff]
    %v1071 = vld [vmem:[#allocation8 + $0x158] sm:$0xff]
    %v1072 = vld [vmem:[#allocation8 + $0x160] sm:$0xff]
    %v1073 = vld [vmem:[#allocation8 + $0x168] sm:$0xff]
    %v1074 = vld [vmem:[#allocation8 + $0x170] sm:$0xff]
    %v1075 = vld [vmem:[#allocation8 + $0x178] sm:$0xff]
    %v1076 = vld [vmem:[%s9] sm:$0x1]
    %v1078 = vlaneseq
    %v1079 = vshrl.u32 %v1078, 7
    %v1080 = vsub.s32 0, %v1079
    %v1081 = vrot.slane %v1076, %v1080
    %1083 = vmatprep.subr.mxu0 0.0
    %1084 = vmatpush1.msra.mxu0 %v1028
    %1085 = vmatprep.subr.mxu0 0.0
    %1086 = vmatpush1.msra.mxu0 %v1029
    %1087 = vmatprep.subr.mxu0 0.0
    %1088 = vmatpush1.msra.mxu0 %v1030
    %1089 = vmatprep.subr.mxu0 0.0
    %1090 = vmatpush1.msra.mxu0 %v1031
    %1091 = vmatprep.subr.mxu0 0.0
    %1092 = vmatpush1.msra.mxu0 %v1032
    %1093 = vmatprep.subr.mxu0 0.0
    %1094 = vmatpush1.msra.mxu0 %v1033
    %1095 = vmatprep.subr.mxu0 0.0
    %1096 = vmatpush1.msra.mxu0 %v1034
    %1097 = vmatprep.subr.mxu0 0.0
    %1098 = vmatpush1.msra.mxu0 %v1035
    %1099 = vmatprep.subr.mxu0 0.0
    %1100 = vmatpush1.msra.mxu0 %v1036
    %1101 = vmatprep.subr.mxu0 0.0
    %1102 = vmatpush1.msra.mxu0 %v1037
    %1103 = vmatprep.subr.mxu0 0.0
    %1104 = vmatpush1.msra.mxu0 %v1038
    %1105 = vmatprep.subr.mxu0 0.0
    %1106 = vmatpush1.msra.mxu0 %v1039
    %1107 = vmatprep.subr.mxu0 0.0
    %1108 = vmatpush1.msra.mxu0 %v1040
    %1109 = vmatprep.subr.mxu0 0.0
    %1110 = vmatpush1.msra.mxu0 %v1041
    %1111 = vmatprep.subr.mxu0 0.0
    %1112 = vmatpush1.msra.mxu0 %v1042
    %1113 = vmatprep.subr.mxu0 0.0
    %1114 = vmatpush1.msra.mxu0 %v1043
    %1115 = vmatprep.subr.mxu0 0.0
    %1116 = vmatpush1.msra.mxu0 %v1044
    %1117 = vmatprep.subr.mxu0 0.0
    %1118 = vmatpush1.msra.mxu0 %v1045
    %1119 = vmatprep.subr.mxu0 0.0
    %1120 = vmatpush1.msra.mxu0 %v1046
    %1121 = vmatprep.subr.mxu0 0.0
    %1122 = vmatpush1.msra.mxu0 %v1047
    %1123 = vmatprep.subr.mxu0 0.0
    %1124 = vmatpush1.msra.mxu0 %v1048
    %1125 = vmatprep.subr.mxu0 0.0
    %1126 = vmatpush1.msra.mxu0 %v1049
    %1127 = vmatprep.subr.mxu0 0.0
    %1128 = vmatpush1.msra.mxu0 %v1050
    %1129 = vmatprep.subr.mxu0 0.0
    %1130 = vmatpush1.msra.mxu0 %v1051
    %1131 = vmatprep.subr.mxu0 0.0
    %1132 = vmatpush1.msra.mxu0 %v1052
    %1133 = vmatprep.subr.mxu0 0.0
    %1134 = vmatpush1.msra.mxu0 %v1053
    %1135 = vmatprep.subr.mxu0 0.0
    %1136 = vmatpush1.msra.mxu0 %v1054
    %1137 = vmatprep.subr.mxu0 0.0
    %1138 = vmatpush1.msra.mxu0 %v1055
    %1139 = vmatprep.subr.mxu0 0.0
    %1140 = vmatpush1.msra.mxu0 %v1056
    %1141 = vmatprep.subr.mxu0 0.0
    %1142 = vmatpush1.msra.mxu0 %v1057
    %1143 = vmatprep.subr.mxu0 0.0
    %1144 = vmatpush1.msra.mxu0 %v1058
    %1145 = vmatprep.subr.mxu0 0.0
    %1146 = vmatpush1.msra.mxu0 %v1059
    %1147 = vmatprep.mubr.f32.mxu0 %v959
    %1148 = vmatmul.mubr.f32.gmra.mrb[0].mxu0 %v996
    %v1149 = vpop.f32.mrb[0].mxu0
    %v1150 = vadd.f32 %v1081, %v1149
    %v1151 = vpop.f32.mrb[0].mxu0
    %1152 = vmatprep.mubr.f32.mxu0 %v960
    %1153 = vmatmul.mubr.f32.gmra.mrb[0].mxu0 %v997
    %v1154 = vpop.f32.mrb[0].mxu0
    %v1155 = vadd.f32 %v1081, %v1154
    %v1156 = vpop.f32.mrb[0].mxu0
    %1157 = vmatprep.mubr.f32.mxu0 %v961
    %1158 = vmatmul.mubr.f32.gmra.mrb[0].mxu0 %v998
    %v1159 = vpop.f32.mrb[0].mxu0
    %v1160 = vadd.f32 %v1081, %v1159
    %v1161 = vpop.f32.mrb[0].mxu0
    %1162 = vmatprep.mubr.f32.mxu0 %v962
    %1163 = vmatmul.mubr.f32.gmra.mrb[0].mxu0 %v999
    %v1164 = vpop.f32.mrb[0].mxu0
    %v1165 = vadd.f32 %v1081, %v1164
    %v1166 = vpop.f32.mrb[0].mxu0
    %1167 = vdwg.mxu0
    %1168 = vmatprep.subr.mxu0 0.0
    %1169 = vmatpush1.msra.mxu0 %v1060
    %1170 = vmatprep.subr.mxu0 0.0
    %1171 = vmatpush1.msra.mxu0 %v1061
    %1172 = vmatprep.subr.mxu0 0.0
    %1173 = vmatpush1.msra.mxu0 %v1062
    %1174 = vmatprep.subr.mxu0 0.0
    %1175 = vmatpush1.msra.mxu0 %v1063
    %1176 = vmatprep.subr.mxu0 0.0
    %1177 = vmatpush1.msra.mxu0 %v1064
    %1178 = vmatprep.subr.mxu0 0.0
    %1179 = vmatpush1.msra.mxu0 %v1065
    %1180 = vmatprep.subr.mxu0 0.0
    %1181 = vmatpush1.msra.mxu0 %v1066
    %1182 = vmatprep.subr.mxu0 0.0
    %1183 = vmatpush1.msra.mxu0 %v1067
    %1184 = vmatprep.subr.mxu0 0.0
    %1185 = vmatpush1.msra.mxu0 %v1068
    %1186 = vmatprep.subr.mxu0 0.0
    %1187 = vmatpush1.msra.mxu0 %v1069
    %1188 = vmatprep.subr.mxu0 0.0
    %1189 = vmatpush1.msra.mxu0 %v1070
    %1190 = vmatprep.subr.mxu0 0.0
    %1191 = vmatpush1.msra.mxu0 %v1071
    %1192 = vmatprep.subr.mxu0 0.0
    %1193 = vmatpush1.msra.mxu0 %v1072
    %1194 = vmatprep.subr.mxu0 0.0
    %1195 = vmatpush1.msra.mxu0 %v1073
    %1196 = vmatprep.subr.mxu0 0.0
    %1197 = vmatpush1.msra.mxu0 %v1074
    %1198 = vmatprep.subr.mxu0 0.0
    %1199 = vmatpush1.msra.mxu0 %v1075
    %1200 = vmatprep.subr.mxu0 0.0
    %1201 = vmatpush1.msra.mxu0 0.0
    %1202 = vmatprep.subr.mxu0 0.0
    %1203 = vmatpush1.msra.mxu0 0.0
    %1204 = vmatprep.subr.mxu0 0.0
    %1205 = vmatpush1.msra.mxu0 0.0
    %1206 = vmatprep.subr.mxu0 0.0
    %1207 = vmatpush1.msra.mxu0 0.0
    %1208 = vmatprep.subr.mxu0 0.0
    %1209 = vmatpush1.msra.mxu0 0.0
    %1210 = vmatprep.subr.mxu0 0.0
    %1211 = vmatpush1.msra.mxu0 0.0
    %1212 = vmatprep.subr.mxu0 0.0
    %1213 = vmatpush1.msra.mxu0 0.0
    %1214 = vmatprep.subr.mxu0 0.0
    %1215 = vmatpush1.msra.mxu0 0.0
    %1216 = vmatprep.subr.mxu0 0.0
    %1217 = vmatpush1.msra.mxu0 0.0
    %1218 = vmatprep.subr.mxu0 0.0
    %1219 = vmatpush1.msra.mxu0 0.0
    %1220 = vmatprep.subr.mxu0 0.0
    %1221 = vmatpush1.msra.mxu0 0.0
    %1222 = vmatprep.subr.mxu0 0.0
    %1223 = vmatpush1.msra.mxu0 0.0
    %1224 = vmatprep.subr.mxu0 0.0
    %1225 = vmatpush1.msra.mxu0 0.0
    %1226 = vmatprep.subr.mxu0 0.0
    %1227 = vmatpush1.msra.mxu0 0.0
    %1228 = vmatprep.subr.mxu0 0.0
    %1229 = vmatpush1.msra.mxu0 0.0
    %1230 = vmatprep.subr.mxu0 0.0
    %1231 = vmatpush1.msra.mxu0 0.0
    %1232 = vmatprep.mubr.f32.mxu0 0.0
    %1233 = vmatmul.mubr.f32.gmra.mrb[0].mxu0 %v1024
    %v1234 = vpop.f32.mrb[0].mxu0
    %v1235 = vadd.f32 %v1150, %v1234
    %v1236 = vpop.f32.mrb[0].mxu0
    %1237 = vmatprep.mubr.f32.mxu0 0.0
    %1238 = vmatmul.mubr.f32.gmra.mrb[0].mxu0 %v1025
    %v1239 = vpop.f32.mrb[0].mxu0
    %v1240 = vadd.f32 %v1155, %v1239
    %v1241 = vpop.f32.mrb[0].mxu0
    %1242 = vmatprep.mubr.f32.mxu0 0.0
    %1243 = vmatmul.mubr.f32.gmra.mrb[0].mxu0 %v1026
    %v1244 = vpop.f32.mrb[0].mxu0
    %v1245 = vadd.f32 %v1160, %v1244
    %v1246 = vpop.f32.mrb[0].mxu0
    %1247 = vmatprep.mubr.f32.mxu0 0.0
    %1248 = vmatmul.mubr.f32.gmra.mrb[0].mxu0 %v1027
    %v1249 = vpop.f32.mrb[0].mxu0
    %v1250 = vadd.f32 %v1165, %v1249
    %v1251 = vpop.f32.mrb[0].mxu0
    %1252 = vdwg.mxu0
    %v1253 = vsub.f32 0.0, %v1235
    %v1254 = vsub.f32 0.0, %v1240
    %v1255 = vsub.f32 0.0, %v1245
    %v1256 = vsub.f32 0.0, %v1250
    %v1257 = vmul.f32 %v1253, 1.442695
    %v1258 = vpow.pop %v1257
    %v1259 = vmul.f32 %v1254, 1.442695
    %v1260 = vpow.pop %v1259
    %v1261 = vmul.f32 %v1255, 1.442695
    %v1262 = vpow.pop %v1261
    %v1263 = vmul.f32 %v1256, 1.442695
    %v1264 = vpow.pop %v1263
    %v1265 = vadd.f32 %v1258, 1.0
    %v1266 = vadd.f32 %v1260, 1.0
    %v1267 = vadd.f32 %v1262, 1.0
    %v1268 = vadd.f32 %v1264, 1.0
    %v1269 = vrcp.pop %v1265
    %v1270 = vrcp.pop %v1266
    %v1271 = vrcp.pop %v1267
    %v1272 = vrcp.pop %v1268
    %v1273 = vmul.f32 %v1235, %v1269
    %v1274 = vmul.f32 %v1240, %v1270
    %v1275 = vmul.f32 %v1245, %v1271
    %v1276 = vmul.f32 %v1250, %v1272
    %vm1277 = vcmp.lt.s32.totalorder %v110, 8
    %vm1278 = vcmp.lt.s32.totalorder %v111, 8
    %vm1279 = vcmp.lt.s32.totalorder %v112, 8
    %vm1280 = vcmp.lt.s32.totalorder %v113, 8
    %v1281 = vsel %vm1277, 1, 0
    %v1282 = vsel %vm1278, 1, 0
    %v1283 = vsel %vm1279, 1, 0
    %v1284 = vsel %vm1280, 1, 0
    %1285 = vset.pattern.permute.xlu0 0
    %1286 = vperm.xlu0 %1285, %v1281
    %v1287 = vpop.permute.xlu0 %1286
    %1288 = vset.pattern.permute.xlu0 0
    %1289 = vperm.xlu0 %1288, %v1282
    %v1290 = vpop.permute.xlu0 %1289
    %1291 = vset.pattern.permute.xlu0 0
    %1292 = vperm.xlu0 %1291, %v1283
    %v1293 = vpop.permute.xlu0 %1292
    %1294 = vset.pattern.permute.xlu0 0
    %1295 = vperm.xlu0 %1294, %v1284
    %v1296 = vpop.permute.xlu0 %1295
    %vm1297 = vcmp.eq.s32.totalorder %v1287, 1
    %vm1298 = vcmp.eq.s32.totalorder %v1290, 1
    %vm1299 = vcmp.eq.s32.totalorder %v1293, 1
    %vm1300 = vcmp.eq.s32.totalorder %v1296, 1
    %v1301 = vsel %vm1297, 0.0, %v1276
    %v1302 = vsel %vm1298, 0.0, %v1273
    %v1303 = vsel %vm1299, 0.0, %v1274
    %v1304 = vsel %vm1300, 0.0, %v1275
    %vm1305 = vcmp.ge.s32.totalorder %v110, 8
    %vm1306 = vcmp.ge.s32.totalorder %v111, 8
    %vm1307 = vcmp.ge.s32.totalorder %v112, 8
    %vm1308 = vcmp.ge.s32.totalorder %v113, 8
    %v1309 = vsel %vm1305, 1, 0
    %v1310 = vsel %vm1306, 1, 0
    %v1311 = vsel %vm1307, 1, 0
    %v1312 = vsel %vm1308, 1, 0
    %1313 = vset.pattern.permute.xlu0 0
    %1314 = vperm.xlu0 %1313, %v1309
    %v1315 = vpop.permute.xlu0 %1314
    %1316 = vset.pattern.permute.xlu0 0
    %1317 = vperm.xlu0 %1316, %v1310
    %v1318 = vpop.permute.xlu0 %1317
    %1319 = vset.pattern.permute.xlu0 0
    %1320 = vperm.xlu0 %1319, %v1311
    %v1321 = vpop.permute.xlu0 %1320
    %1322 = vset.pattern.permute.xlu0 0
    %1323 = vperm.xlu0 %1322, %v1312
    %v1324 = vpop.permute.xlu0 %1323
    %vm1325 = vcmp.eq.s32.totalorder %v1315, 1
    %vm1326 = vcmp.eq.s32.totalorder %v1318, 1
    %vm1327 = vcmp.eq.s32.totalorder %v1321, 1
    %vm1328 = vcmp.eq.s32.totalorder %v1324, 1
    %v1329 = vsel %vm1325, 0.0, %v1274
    %v1330 = vsel %vm1326, 0.0, %v1275
    %v1331 = vsel %vm1327, 0.0, %v1276
    %v1332 = vsel %vm1328, 0.0, %v1273
    %v1333 = vld [vmem:[#allocation10] sm:$0xff]
    %v1334 = vld [vmem:[#allocation10 + $0x8] sm:$0xff]
    %v1335 = vld [vmem:[#allocation10 + $0x10] sm:$0xff]
    %v1336 = vld [vmem:[#allocation10 + $0x18] sm:$0xff]
    %v1337 = vld [vmem:[#allocation10 + $0x20] sm:$0xff]
    %v1338 = vld [vmem:[#allocation10 + $0x28] sm:$0xff]
    %v1339 = vld [vmem:[#allocation10 + $0x30] sm:$0xff]
    %v1340 = vld [vmem:[#allocation10 + $0x38] sm:$0xff]
    %v1341 = vld [vmem:[#allocation10 + $0x40] sm:$0xff]
    %v1342 = vld [vmem:[#allocation10 + $0x48] sm:$0xff]
    %v1343 = vld [vmem:[#allocation10 + $0x50] sm:$0xff]
    %v1344 = vld [vmem:[#allocation10 + $0x58] sm:$0xff]
    %v1345 = vld [vmem:[#allocation10 + $0x60] sm:$0xff]
    %v1346 = vld [vmem:[#allocation10 + $0x68] sm:$0xff]
    %v1347 = vld [vmem:[#allocation10 + $0x70] sm:$0xff]
    %v1348 = vld [vmem:[#allocation10 + $0x78] sm:$0xff]
    %v1349 = vld [vmem:[#allocation10 + $0x80] sm:$0xff]
    %v1350 = vld [vmem:[#allocation10 + $0x88] sm:$0xff]
    %v1351 = vld [vmem:[#allocation10 + $0x90] sm:$0xff]
    %v1352 = vld [vmem:[#allocation10 + $0x98] sm:$0xff]
    %v1353 = vld [vmem:[#allocation10 + $0xa0] sm:$0xff]
    %v1354 = vld [vmem:[#allocation10 + $0xa8] sm:$0xff]
    %v1355 = vld [vmem:[#allocation10 + $0xb0] sm:$0xff]
    %v1356 = vld [vmem:[#allocation10 + $0xb8] sm:$0xff]
    %v1357 = vld [vmem:[#allocation10 + $0xc0] sm:$0xff]
    %v1358 = vld [vmem:[#allocation10 + $0xc8] sm:$0xff]
    %v1359 = vld [vmem:[#allocation10 + $0xd0] sm:$0xff]
    %v1360 = vld [vmem:[#allocation10 + $0xd8] sm:$0xff]
    %v1361 = vld [vmem:[#allocation10 + $0xe0] sm:$0xff]
    %v1362 = vld [vmem:[#allocation10 + $0xe8] sm:$0xff]
    %v1363 = vld [vmem:[#allocation10 + $0xf0] sm:$0xff]
    %v1364 = vld [vmem:[#allocation10 + $0xf8] sm:$0xff]
    %v1365 = vld [vmem:[#allocation10 + $0x100] sm:$0xff]
    %v1366 = vld [vmem:[#allocation10 + $0x108] sm:$0xff]
    %v1367 = vld [vmem:[#allocation10 + $0x110] sm:$0xff]
    %v1368 = vld [vmem:[#allocation10 + $0x118] sm:$0xff]
    %v1369 = vld [vmem:[#allocation10 + $0x120] sm:$0xff]
    %v1370 = vld [vmem:[#allocation10 + $0x128] sm:$0xff]
    %v1371 = vld [vmem:[#allocation10 + $0x130] sm:$0xff]
    %v1372 = vld [vmem:[#allocation10 + $0x138] sm:$0xff]
    %v1373 = vld [vmem:[#allocation10 + $0x140] sm:$0xff]
    %v1374 = vld [vmem:[#allocation10 + $0x148] sm:$0xff]
    %v1375 = vld [vmem:[#allocation10 + $0x150] sm:$0xff]
    %v1376 = vld [vmem:[#allocation10 + $0x158] sm:$0xff]
    %v1377 = vld [vmem:[#allocation10 + $0x160] sm:$0xff]
    %v1378 = vld [vmem:[#allocation10 + $0x168] sm:$0xff]
    %v1379 = vld [vmem:[#allocation10 + $0x170] sm:$0xff]
    %v1380 = vld [vmem:[#allocation10 + $0x178] sm:$0xff]
    %v1381 = vld [vmem:[%s11] sm:$0x1]
    %v1383 = vlaneseq
    %v1384 = vshrl.u32 %v1383, 7
    %v1385 = vsub.s32 0, %v1384
    %v1386 = vrot.slane %v1381, %v1385
    %1388 = vmatprep.subr.mxu0 0.0
    %1389 = vmatpush1.msra.mxu0 %v1333
    %1390 = vmatprep.subr.mxu0 0.0
    %1391 = vmatpush1.msra.mxu0 %v1334
    %1392 = vmatprep.subr.mxu0 0.0
    %1393 = vmatpush1.msra.mxu0 %v1335
    %1394 = vmatprep.subr.mxu0 0.0
    %1395 = vmatpush1.msra.mxu0 %v1336
    %1396 = vmatprep.subr.mxu0 0.0
    %1397 = vmatpush1.msra.mxu0 %v1337
    %1398 = vmatprep.subr.mxu0 0.0
    %1399 = vmatpush1.msra.mxu0 %v1338
    %1400 = vmatprep.subr.mxu0 0.0
    %1401 = vmatpush1.msra.mxu0 %v1339
    %1402 = vmatprep.subr.mxu0 0.0
    %1403 = vmatpush1.msra.mxu0 %v1340
    %1404 = vmatprep.subr.mxu0 0.0
    %1405 = vmatpush1.msra.mxu0 %v1341
    %1406 = vmatprep.subr.mxu0 0.0
    %1407 = vmatpush1.msra.mxu0 %v1342
    %1408 = vmatprep.subr.mxu0 0.0
    %1409 = vmatpush1.msra.mxu0 %v1343
    %1410 = vmatprep.subr.mxu0 0.0
    %1411 = vmatpush1.msra.mxu0 %v1344
    %1412 = vmatprep.subr.mxu0 0.0
    %1413 = vmatpush1.msra.mxu0 %v1345
    %1414 = vmatprep.subr.mxu0 0.0
    %1415 = vmatpush1.msra.mxu0 %v1346
    %1416 = vmatprep.subr.mxu0 0.0
    %1417 = vmatpush1.msra.mxu0 %v1347
    %1418 = vmatprep.subr.mxu0 0.0
    %1419 = vmatpush1.msra.mxu0 %v1348
    %1420 = vmatprep.subr.mxu0 0.0
    %1421 = vmatpush1.msra.mxu0 %v1349
    %1422 = vmatprep.subr.mxu0 0.0
    %1423 = vmatpush1.msra.mxu0 %v1350
    %1424 = vmatprep.subr.mxu0 0.0
    %1425 = vmatpush1.msra.mxu0 %v1351
    %1426 = vmatprep.subr.mxu0 0.0
    %1427 = vmatpush1.msra.mxu0 %v1352
    %1428 = vmatprep.subr.mxu0 0.0
    %1429 = vmatpush1.msra.mxu0 %v1353
    %1430 = vmatprep.subr.mxu0 0.0
    %1431 = vmatpush1.msra.mxu0 %v1354
    %1432 = vmatprep.subr.mxu0 0.0
    %1433 = vmatpush1.msra.mxu0 %v1355
    %1434 = vmatprep.subr.mxu0 0.0
    %1435 = vmatpush1.msra.mxu0 %v1356
    %1436 = vmatprep.subr.mxu0 0.0
    %1437 = vmatpush1.msra.mxu0 %v1357
    %1438 = vmatprep.subr.mxu0 0.0
    %1439 = vmatpush1.msra.mxu0 %v1358
    %1440 = vmatprep.subr.mxu0 0.0
    %1441 = vmatpush1.msra.mxu0 %v1359
    %1442 = vmatprep.subr.mxu0 0.0
    %1443 = vmatpush1.msra.mxu0 %v1360
    %1444 = vmatprep.subr.mxu0 0.0
    %1445 = vmatpush1.msra.mxu0 %v1361
    %1446 = vmatprep.subr.mxu0 0.0
    %1447 = vmatpush1.msra.mxu0 %v1362
    %1448 = vmatprep.subr.mxu0 0.0
    %1449 = vmatpush1.msra.mxu0 %v1363
    %1450 = vmatprep.subr.mxu0 0.0
    %1451 = vmatpush1.msra.mxu0 %v1364
    %1452 = vmatprep.mubr.f32.mxu0 %v1273
    %1453 = vmatmul.mubr.f32.gmra.mrb[0].mxu0 %v1301
    %v1454 = vpop.f32.mrb[0].mxu0
    %v1455 = vadd.f32 %v1386, %v1454
    %v1456 = vpop.f32.mrb[0].mxu0
    %1457 = vmatprep.mubr.f32.mxu0 %v1274
    %1458 = vmatmul.mubr.f32.gmra.mrb[0].mxu0 %v1302
    %v1459 = vpop.f32.mrb[0].mxu0
    %v1460 = vadd.f32 %v1386, %v1459
    %v1461 = vpop.f32.mrb[0].mxu0
    %1462 = vmatprep.mubr.f32.mxu0 %v1275
    %1463 = vmatmul.mubr.f32.gmra.mrb[0].mxu0 %v1303
    %v1464 = vpop.f32.mrb[0].mxu0
    %v1465 = vadd.f32 %v1386, %v1464
    %v1466 = vpop.f32.mrb[0].mxu0
    %1467 = vmatprep.mubr.f32.mxu0 %v1276
    %1468 = vmatmul.mubr.f32.gmra.mrb[0].mxu0 %v1304
    %v1469 = vpop.f32.mrb[0].mxu0
    %v1470 = vadd.f32 %v1386, %v1469
    %v1471 = vpop.f32.mrb[0].mxu0
    %1472 = vdwg.mxu0
    %1473 = vmatprep.subr.mxu0 0.0
    %1474 = vmatpush1.msra.mxu0 %v1365
    %1475 = vmatprep.subr.mxu0 0.0
    %1476 = vmatpush1.msra.mxu0 %v1366
    %1477 = vmatprep.subr.mxu0 0.0
    %1478 = vmatpush1.msra.mxu0 %v1367
    %1479 = vmatprep.subr.mxu0 0.0
    %1480 = vmatpush1.msra.mxu0 %v1368
    %1481 = vmatprep.subr.mxu0 0.0
    %1482 = vmatpush1.msra.mxu0 %v1369
    %1483 = vmatprep.subr.mxu0 0.0
    %1484 = vmatpush1.msra.mxu0 %v1370
    %1485 = vmatprep.subr.mxu0 0.0
    %1486 = vmatpush1.msra.mxu0 %v1371
    %1487 = vmatprep.subr.mxu0 0.0
    %1488 = vmatpush1.msra.mxu0 %v1372
    %1489 = vmatprep.subr.mxu0 0.0
    %1490 = vmatpush1.msra.mxu0 %v1373
    %1491 = vmatprep.subr.mxu0 0.0
    %1492 = vmatpush1.msra.mxu0 %v1374
    %1493 = vmatprep.subr.mxu0 0.0
    %1494 = vmatpush1.msra.mxu0 %v1375
    %1495 = vmatprep.subr.mxu0 0.0
    %1496 = vmatpush1.msra.mxu0 %v1376
    %1497 = vmatprep.subr.mxu0 0.0
    %1498 = vmatpush1.msra.mxu0 %v1377
    %1499 = vmatprep.subr.mxu0 0.0
    %1500 = vmatpush1.msra.mxu0 %v1378
    %1501 = vmatprep.subr.mxu0 0.0
    %1502 = vmatpush1.msra.mxu0 %v1379
    %1503 = vmatprep.subr.mxu0 0.0
    %1504 = vmatpush1.msra.mxu0 %v1380
    %1505 = vmatprep.subr.mxu0 0.0
    %1506 = vmatpush1.msra.mxu0 0.0
    %1507 = vmatprep.subr.mxu0 0.0
    %1508 = vmatpush1.msra.mxu0 0.0
    %1509 = vmatprep.subr.mxu0 0.0
    %1510 = vmatpush1.msra.mxu0 0.0
    %1511 = vmatprep.subr.mxu0 0.0
    %1512 = vmatpush1.msra.mxu0 0.0
    %1513 = vmatprep.subr.mxu0 0.0
    %1514 = vmatpush1.msra.mxu0 0.0
    %1515 = vmatprep.subr.mxu0 0.0
    %1516 = vmatpush1.msra.mxu0 0.0
    %1517 = vmatprep.subr.mxu0 0.0
    %1518 = vmatpush1.msra.mxu0 0.0
    %1519 = vmatprep.subr.mxu0 0.0
    %1520 = vmatpush1.msra.mxu0 0.0
    %1521 = vmatprep.subr.mxu0 0.0
    %1522 = vmatpush1.msra.mxu0 0.0
    %1523 = vmatprep.subr.mxu0 0.0
    %1524 = vmatpush1.msra.mxu0 0.0
    %1525 = vmatprep.subr.mxu0 0.0
    %1526 = vmatpush1.msra.mxu0 0.0
    %1527 = vmatprep.subr.mxu0 0.0
    %1528 = vmatpush1.msra.mxu0 0.0
    %1529 = vmatprep.subr.mxu0 0.0
    %1530 = vmatpush1.msra.mxu0 0.0
    %1531 = vmatprep.subr.mxu0 0.0
    %1532 = vmatpush1.msra.mxu0 0.0
    %1533 = vmatprep.subr.mxu0 0.0
    %1534 = vmatpush1.msra.mxu0 0.0
    %1535 = vmatprep.subr.mxu0 0.0
    %1536 = vmatpush1.msra.mxu0 0.0
    %1537 = vmatprep.mubr.f32.mxu0 0.0
    %1538 = vmatmul.mubr.f32.gmra.mrb[0].mxu0 %v1329
    %v1539 = vpop.f32.mrb[0].mxu0
    %v1540 = vadd.f32 %v1455, %v1539
    %v1541 = vpop.f32.mrb[0].mxu0
    %1542 = vmatprep.mubr.f32.mxu0 0.0
    %1543 = vmatmul.mubr.f32.gmra.mrb[0].mxu0 %v1330
    %v1544 = vpop.f32.mrb[0].mxu0
    %v1545 = vadd.f32 %v1460, %v1544
    %v1546 = vpop.f32.mrb[0].mxu0
    %1547 = vmatprep.mubr.f32.mxu0 0.0
    %1548 = vmatmul.mubr.f32.gmra.mrb[0].mxu0 %v1331
    %v1549 = vpop.f32.mrb[0].mxu0
    %v1550 = vadd.f32 %v1465, %v1549
    %v1551 = vpop.f32.mrb[0].mxu0
    %1552 = vmatprep.mubr.f32.mxu0 0.0
    %1553 = vmatmul.mubr.f32.gmra.mrb[0].mxu0 %v1332
    %v1554 = vpop.f32.mrb[0].mxu0
    %v1555 = vadd.f32 %v1470, %v1554
    %v1556 = vpop.f32.mrb[0].mxu0
    %1557 = vdwg.mxu0
    %1558 = vst [vmem:[#allocation11] sm:$0xff] %v1540
    %1559 = vst [vmem:[#allocation11 + $0x8] sm:$0xff] %v1545
    %1560 = vst [vmem:[#allocation11 + $0x10] sm:$0xff] %v1550
    %1561 = vst [vmem:[#allocation11 + $0x18] sm:$0xff] %v1555
    // Predicated region
    $region70: #{tpu_custom_call.1} parent=1 // pred_check
      _
    $region71: #{tpu_custom_call.1} parent=1 // pred_check_branch
      %1563 = sbr.rel (0) target = $region73
    $region72: #{tpu_custom_call.1} parent=1 // pred_region
      %s1565 = ssub.s32 512, 512
      %1566 = vsyncadd [#allocation4], %s1565
      %s1567 = sshll.u32 [#allocation11], 4
      %s1568 = int_to_ptr.vmem [resolvable:$true] %s1567
      %1573 = dma.vmem_to_hbm [thread:$0]  %s1568, 512, %s12, [#allocation4], 128, 128, 8
    $region73: #{tpu_custom_call.1} parent=1 // pred_fallthru
      _
    // Predicated region
    $region74: #{tpu_custom_call.1} parent=1 // pred_check
      _
    $region75: #{tpu_custom_call.1} parent=1 // pred_check_branch
      %1575 = sbr.rel (0) target = $region77
    $region76: #{tpu_custom_call.1} parent=1 // pred_region
      %1576 = dma.done [#allocation4], 512
    $region77: #{tpu_custom_call.1} parent=1 // pred_fallthru
      _
    %1577 = vsyncpa [#allocation3], 1
    %1578 = vsyncpa [#allocation6], 1
    %1579 = vsyncpa [#allocation9], 1
    %1580 = vsyncpa [#allocation4], 1

</llo_original>
